<compile_context>
chip_gen: v5e
topology: v5e:2x2
jax: 0.10.0
libtpu: 0.0.40
codegen_flags: <defaults>
</compile_context>

<pallas_src>
import functools

import jax
import jax.numpy as jnp
from jax.experimental import pallas as pl
from jax.experimental.pallas import tpu as pltpu

_H1, _H2, _OUT = 128, 64, 2


def _round_up(x, m):
    return (x + m - 1) // m * m


def _mlp_kernel(x_ref, w1_ref, b1_ref, w2_ref, b2_ref, w3_ref, b3_ref, o_ref,
                *, precision):
    # Layer 1: [TB, D] @ [D, 128] + [1, 128], ReLU
    h1 = jnp.dot(x_ref[...], w1_ref[...],
                 preferred_element_type=jnp.float32, precision=precision)
    h1 = jnp.maximum(h1 + b1_ref[...], 0.0)
    # Layer 2: [TB, 128] @ [128, 64] + [1, 64], ReLU
    h2 = jnp.dot(h1, w2_ref[...],
                 preferred_element_type=jnp.float32, precision=precision)
    h2 = jnp.maximum(h2 + b2_ref[...], 0.0)
    # Layer 3: [TB, 64] @ [64, 2] + [1, 2]  (lane-narrow store; in-VMEM masked
    # vst hides under the DMA for this memory-bound kernel).
    out = jnp.dot(h2, w3_ref[...],
                  preferred_element_type=jnp.float32, precision=precision)
    o_ref[...] = (out + b3_ref[...]).astype(o_ref.dtype)


def _vmem_capacity_bytes():
    try:
        info = pltpu.get_tpu_info()
        return int(getattr(info, "vmem_capacity_bytes", 64 << 20))
    except Exception:
        return 64 << 20  # conservative default (v7x-sized)


def mlp_regression(x, w1, b1, w2, b2, w3, b3, *, block_b=512, precision=None):
    """Fused MLP forward. x: [B, D] float32 -> [B, 2] float32."""
    B, D = x.shape
    H1, H2, OUT = w1.shape[1], w2.shape[1], w3.shape[1]

    # ---- VMEM budget (generation aware) -------------------------------------
    vmem_cap = _vmem_capacity_bytes()          # 128 MiB v5e/v6e, 64 MiB v7x
    vmem_limit = int(vmem_cap * 3 // 4)
    # Weights/biases stay VMEM-resident; count them 2x so the double-buffered
    # fallback path is also covered.
    weight_bytes = 4 * (D * H1 + H1 + H1 * H2 + H2 + H2 * OUT + OUT)
    # Per batch-row cost: double-buffered x row + out row, f32 h1/h2 temps.
    per_row_bytes = 4 * (2 * D + 2 * OUT + H1 + H2)
    usable = vmem_limit - 2 * weight_bytes - (4 << 20)   # 4 MiB compiler slack
    rows_cap = max(8, (usable // per_row_bytes) // 8 * 8)

    # ---- Batch tiling --------------------------------------------------------
    # Aim for ~block_b rows per grid step (the ~85%-of-roofline DMA sweet spot),
    # force >= 2 steps so v7x's second TensorCore gets work, and never pad x:
    # Pallas masks the partial last block, so the only waste is < TB rows of
    # compute on the final step (no extra HBM pass from jnp.pad).
    n_steps = pl.cdiv(B, block_b)
    if B >= 16:
        n_steps = max(n_steps, 2)
    TB = max(8, min(_round_up(pl.cdiv(B, n_steps), 8), rows_cap))
    grid = (pl.cdiv(B, TB),)

    kernel = functools.partial(_mlp_kernel, precision=precision)
    out_shape = jax.ShapeDtypeStruct((B, OUT), jnp.float32)
    compiler_params = pltpu.CompilerParams(
        dimension_semantics=("parallel",),   # megacore-split the batch on v7x
        vmem_limit_bytes=vmem_limit,
    )

    def build(single_buffer_weights):
        if single_buffer_weights:
            const = lambda shape: pl.BlockSpec(
                shape, lambda i: (0, 0), pipeline_mode=pl.Buffered(1))
        else:
            const = lambda shape: pl.BlockSpec(shape, lambda i: (0, 0))
        return pl.pallas_call(
            kernel,
            out_shape=out_shape,
            grid=grid,
            in_specs=[
                pl.BlockSpec((TB, D), lambda i: (i, 0)),    # x: tiled over batch
                const(w1.shape), const(b1.shape),           # params: VMEM-resident
                const(w2.shape), const(b2.shape),
                const(w3.shape), const(b3.shape),
            ],
            out_specs=pl.BlockSpec((TB, OUT), lambda i: (i, 0)),  # lane-narrow [B, 2]
            compiler_params=compiler_params,
        )

    args = (x, w1, b1, w2, b2, w3, b3)
    try:
        return build(True)(*args)
    except Exception:
        # Older JAX without BlockSpec(pipeline_mode=pl.Buffered(1)): fall back to
        # default (double-buffered) constant blocks.
        return build(False)(*args)


def init_params(key, input_dim):
    """Parameter init matching the PyTorch module's shapes.
    PyTorch nn.Linear uses U(-1/sqrt(fan_in), 1/sqrt(fan_in)); we mirror that.
    Weights are stored [in, out] (transpose of PyTorch) so y = x @ W + b."""
    dims = [(input_dim, _H1), (_H1, _H2), (_H2, _OUT)]
    params = []
    for i, (fan_in, fan_out) in enumerate(dims):
        kw, kb = jax.random.split(jax.random.fold_in(key, i))
        bound = 1.0 / jnp.sqrt(jnp.float32(fan_in))
        w = jax.random.uniform(kw, (fan_in, fan_out), jnp.float32, -bound, bound)
        b = jax.random.uniform(kb, (1, fan_out), jnp.float32, -bound, bound)
        params += [w, b]
    return params


def mlp_reference(x, w1, b1, w2, b2, w3, b3, *, precision=None):
    h1 = jnp.maximum(jnp.dot(x, w1, precision=precision) + b1, 0.0)
    h2 = jnp.maximum(jnp.dot(h1, w2, precision=precision) + b2, 0.0)
    return jnp.dot(h2, w3, precision=precision) + b3


if __name__ == "__main__":
    key = jax.random.PRNGKey(0)
    batch, input_dim = 8, 32

    kx, kp = jax.random.split(key)
    x = jax.random.normal(kx, (batch, input_dim), jnp.float32)
    w1, b1, w2, b2, w3, b3 = init_params(kp, input_dim)

    # HIGHEST precision on BOTH sides pins kernel and reference to the same f32
    # matmul numerics (matching the f32 PyTorch module). The kernel is HBM-bound,
    # so production use can pass precision=None (default) for extra MXU headroom.
    hp = jax.lax.Precision.HIGHEST
    out = mlp_regression(x, w1, b1, w2, b2, w3, b3, precision=hp)
    out = jax.block_until_ready(out)

    ref = mlp_reference(x, w1, b1, w2, b2, w3, b3, precision=hp)
    assert out.shape == (batch, _OUT), out.shape
    assert jnp.allclose(out, ref, atol=1e-5, rtol=1e-5), (
        f"max abs err {jnp.max(jnp.abs(out - ref))}"
    )
    print("KERNEL_OK")
</pallas_src>

<mosaic_0001>
module attributes {stable_mosaic.version = 11 : i64} {
  func.func @_mlp_kernel(%arg0: i32, %arg1: memref<8x32xf32, #tpu.memory_space<vmem>>, %arg2: memref<32x128xf32, #tpu.memory_space<vmem>>, %arg3: memref<1x128xf32, #tpu.memory_space<vmem>>, %arg4: memref<128x64xf32, #tpu.memory_space<vmem>>, %arg5: memref<1x64xf32, #tpu.memory_space<vmem>>, %arg6: memref<64x2xf32, #tpu.memory_space<vmem>>, %arg7: memref<1x2xf32, #tpu.memory_space<vmem>>, %arg8: memref<8x2xf32, #tpu.memory_space<vmem>>) attributes {dimension_semantics = [#tpu.dimension_semantics<parallel>], iteration_bounds = array<i64: 1>, scalar_prefetch = 0 : i64, scratch_operands = 0 : i64, tpu.core_type = #tpu.core_type<tc>, window_params = [{transform_indices = @transform_0, window_bounds = array<i64: 8, 32>}, {pipeline_mode = #tpu.pipeline_mode<synchronous>, transform_indices = @transform_1, window_bounds = array<i64: 32, 128>}, {pipeline_mode = #tpu.pipeline_mode<synchronous>, transform_indices = @transform_2, window_bounds = array<i64: 1, 128>}, {pipeline_mode = #tpu.pipeline_mode<synchronous>, transform_indices = @transform_3, window_bounds = array<i64: 128, 64>}, {pipeline_mode = #tpu.pipeline_mode<synchronous>, transform_indices = @transform_4, window_bounds = array<i64: 1, 64>}, {pipeline_mode = #tpu.pipeline_mode<synchronous>, transform_indices = @transform_5, window_bounds = array<i64: 64, 2>}, {pipeline_mode = #tpu.pipeline_mode<synchronous>, transform_indices = @transform_6, window_bounds = array<i64: 1, 2>}, {transform_indices = @transform_7, window_bounds = array<i64: 8, 2>}]} {
    %c0 = arith.constant 0 : index
    %c0_0 = arith.constant 0 : index
    %0 = vector.load %arg1[%c0, %c0_0] : memref<8x32xf32, #tpu.memory_space<vmem>>, vector<8x32xf32>
    %c0_1 = arith.constant 0 : index
    %c0_2 = arith.constant 0 : index
    %1 = vector.load %arg2[%c0_1, %c0_2] : memref<32x128xf32, #tpu.memory_space<vmem>>, vector<32x128xf32>
    %cst = arith.constant dense<0.000000e+00> : vector<8x128xf32>
    %2 = tpu.matmul %0, %1, %cst {dimension_numbers = #tpu.dot_dimension_numbers<[1], [0], [0], [1], [0, 0, 1, 1], [], []>, precision = #tpu.contract_precision<fp32>} : vector<8x32xf32>, vector<32x128xf32>, vector<8x128xf32> -> vector<8x128xf32>
    %c0_3 = arith.constant 0 : index
    %c0_4 = arith.constant 0 : index
    %3 = vector.load %arg3[%c0_3, %c0_4] : memref<1x128xf32, #tpu.memory_space<vmem>>, vector<1x128xf32>
    %4 = vector.broadcast %3 : vector<1x128xf32> to vector<8x128xf32>
    %5 = arith.addf %2, %4 : vector<8x128xf32>
    %cst_5 = arith.constant 0.000000e+00 : f32
    %6 = vector.broadcast %cst_5 : f32 to vector<8x128xf32>
    %7 = arith.maximumf %5, %6 : vector<8x128xf32>
    %c0_6 = arith.constant 0 : index
    %c0_7 = arith.constant 0 : index
    %8 = vector.load %arg4[%c0_6, %c0_7] : memref<128x64xf32, #tpu.memory_space<vmem>>, vector<128x64xf32>
    %cst_8 = arith.constant dense<0.000000e+00> : vector<8x64xf32>
    %9 = tpu.matmul %7, %8, %cst_8 {dimension_numbers = #tpu.dot_dimension_numbers<[1], [0], [0], [1], [0, 0, 1, 1], [], []>, precision = #tpu.contract_precision<fp32>} : vector<8x128xf32>, vector<128x64xf32>, vector<8x64xf32> -> vector<8x64xf32>
    %c0_9 = arith.constant 0 : index
    %c0_10 = arith.constant 0 : index
    %10 = vector.load %arg5[%c0_9, %c0_10] : memref<1x64xf32, #tpu.memory_space<vmem>>, vector<1x64xf32>
    %11 = vector.broadcast %10 : vector<1x64xf32> to vector<8x64xf32>
    %12 = arith.addf %9, %11 : vector<8x64xf32>
    %cst_11 = arith.constant 0.000000e+00 : f32
    %13 = vector.broadcast %cst_11 : f32 to vector<8x64xf32>
    %14 = arith.maximumf %12, %13 : vector<8x64xf32>
    %c0_12 = arith.constant 0 : index
    %c0_13 = arith.constant 0 : index
    %15 = vector.load %arg6[%c0_12, %c0_13] : memref<64x2xf32, #tpu.memory_space<vmem>>, vector<64x2xf32>
    %cst_14 = arith.constant dense<0.000000e+00> : vector<8x2xf32>
    %16 = tpu.matmul %14, %15, %cst_14 {dimension_numbers = #tpu.dot_dimension_numbers<[1], [0], [0], [1], [0, 0, 1, 1], [], []>, precision = #tpu.contract_precision<fp32>} : vector<8x64xf32>, vector<64x2xf32>, vector<8x2xf32> -> vector<8x2xf32>
    %c0_15 = arith.constant 0 : index
    %c0_16 = arith.constant 0 : index
    %17 = vector.load %arg7[%c0_15, %c0_16] : memref<1x2xf32, #tpu.memory_space<vmem>>, vector<1x2xf32>
    %18 = vector.broadcast %17 : vector<1x2xf32> to vector<8x2xf32>
    %19 = arith.addf %16, %18 : vector<8x2xf32>
    %c0_17 = arith.constant 0 : index
    %c0_18 = arith.constant 0 : index
    %20 = vector.load %arg8[%c0_17, %c0_18] : memref<8x2xf32, #tpu.memory_space<vmem>>, vector<8x2xf32>
    tpu.vector_store %arg8[%c0_17, %c0_18], %19 {strides = array<i32>} : memref<8x2xf32, #tpu.memory_space<vmem>>, vector<8x2xf32>,
    return
  }
  func.func @transform_0(%arg0: i32) -> (i32, i32) {
    %c0_i32 = arith.constant 0 : i32
    %c0_i32_0 = arith.constant 0 : i32
    return %arg0, %c0_i32 : i32, i32
  }
  func.func @transform_1(%arg0: i32) -> (i32, i32) {
    %c0_i32 = arith.constant 0 : i32
    %c0_i32_0 = arith.constant 0 : i32
    %c0_i32_1 = arith.constant 0 : i32
    return %c0_i32, %c0_i32_0 : i32, i32
  }
  func.func @transform_2(%arg0: i32) -> (i32, i32) {
    %c0_i32 = arith.constant 0 : i32
    %c0_i32_0 = arith.constant 0 : i32
    %c0_i32_1 = arith.constant 0 : i32
    return %c0_i32, %c0_i32_0 : i32, i32
  }
  func.func @transform_3(%arg0: i32) -> (i32, i32) {
    %c0_i32 = arith.constant 0 : i32
    %c0_i32_0 = arith.constant 0 : i32
    %c0_i32_1 = arith.constant 0 : i32
    return %c0_i32, %c0_i32_0 : i32, i32
  }
  func.func @transform_4(%arg0: i32) -> (i32, i32) {
    %c0_i32 = arith.constant 0 : i32
    %c0_i32_0 = arith.constant 0 : i32
    %c0_i32_1 = arith.constant 0 : i32
    return %c0_i32, %c0_i32_0 : i32, i32
  }
  func.func @transform_5(%arg0: i32) -> (i32, i32) {
    %c0_i32 = arith.constant 0 : i32
    %c0_i32_0 = arith.constant 0 : i32
    %c0_i32_1 = arith.constant 0 : i32
    return %c0_i32, %c0_i32_0 : i32, i32
  }
  func.func @transform_6(%arg0: i32) -> (i32, i32) {
    %c0_i32 = arith.constant 0 : i32
    %c0_i32_0 = arith.constant 0 : i32
    %c0_i32_1 = arith.constant 0 : i32
    return %c0_i32, %c0_i32_0 : i32, i32
  }
  func.func @transform_7(%arg0: i32) -> (i32, i32) {
    %c0_i32 = arith.constant 0 : i32
    %c0_i32_0 = arith.constant 0 : i32
    return %arg0, %c0_i32 : i32, i32
  }
}

module attributes {stable_mosaic.version = 11 : i64} {
  func.func @_mlp_kernel(%arg0: i32, %arg1: memref<8x32xf32, #tpu.memory_space<vmem>>, %arg2: memref<32x128xf32, #tpu.memory_space<vmem>>, %arg3: memref<1x128xf32, #tpu.memory_space<vmem>>, %arg4: memref<128x64xf32, #tpu.memory_space<vmem>>, %arg5: memref<1x64xf32, #tpu.memory_space<vmem>>, %arg6: memref<64x2xf32, #tpu.memory_space<vmem>>, %arg7: memref<1x2xf32, #tpu.memory_space<vmem>>, %arg8: memref<8x2xf32, #tpu.memory_space<vmem>>) attributes {dimension_semantics = [#tpu.dimension_semantics<parallel>], iteration_bounds = array<i64: 1>, scalar_prefetch = 0 : i64, scratch_operands = 0 : i64, tpu.core_type = #tpu.core_type<tc>, window_params = [{transform_indices = @transform_0, window_bounds = array<i64: 8, 32>}, {pipeline_mode = #tpu.pipeline_mode<synchronous>, transform_indices = @transform_1, window_bounds = array<i64: 32, 128>}, {pipeline_mode = #tpu.pipeline_mode<synchronous>, transform_indices = @transform_2, window_bounds = array<i64: 1, 128>}, {pipeline_mode = #tpu.pipeline_mode<synchronous>, transform_indices = @transform_3, window_bounds = array<i64: 128, 64>}, {pipeline_mode = #tpu.pipeline_mode<synchronous>, transform_indices = @transform_4, window_bounds = array<i64: 1, 64>}, {pipeline_mode = #tpu.pipeline_mode<synchronous>, transform_indices = @transform_5, window_bounds = array<i64: 64, 2>}, {pipeline_mode = #tpu.pipeline_mode<synchronous>, transform_indices = @transform_6, window_bounds = array<i64: 1, 2>}, {transform_indices = @transform_7, window_bounds = array<i64: 8, 2>}]} {
    %c0 = arith.constant 0 : index
    %c0_0 = arith.constant 0 : index
    %0 = vector.load %arg1[%c0, %c0_0] : memref<8x32xf32, #tpu.memory_space<vmem>>, vector<8x32xf32>
    %c0_1 = arith.constant 0 : index
    %c0_2 = arith.constant 0 : index
    %1 = vector.load %arg2[%c0_1, %c0_2] : memref<32x128xf32, #tpu.memory_space<vmem>>, vector<32x128xf32>
    %cst = arith.constant dense<0.000000e+00> : vector<8x128xf32>
    %2 = tpu.matmul %0, %1, %cst {dimension_numbers = #tpu.dot_dimension_numbers<[1], [0], [0], [1], [0, 0, 1, 1], [], []>, precision = #tpu.contract_precision<fp32>} : vector<8x32xf32>, vector<32x128xf32>, vector<8x128xf32> -> vector<8x128xf32>
    %c0_3 = arith.constant 0 : index
    %c0_4 = arith.constant 0 : index
    %3 = vector.load %arg3[%c0_3, %c0_4] : memref<1x128xf32, #tpu.memory_space<vmem>>, vector<1x128xf32>
    %4 = vector.broadcast %3 : vector<1x128xf32> to vector<8x128xf32>
    %5 = arith.addf %2, %4 : vector<8x128xf32>
    %cst_5 = arith.constant 0.000000e+00 : f32
    %6 = vector.broadcast %cst_5 : f32 to vector<8x128xf32>
    %7 = arith.maximumf %5, %6 : vector<8x128xf32>
    %c0_6 = arith.constant 0 : index
    %c0_7 = arith.constant 0 : index
    %8 = vector.load %arg4[%c0_6, %c0_7] : memref<128x64xf32, #tpu.memory_space<vmem>>, vector<128x64xf32>
    %cst_8 = arith.constant dense<0.000000e+00> : vector<8x64xf32>
    %9 = tpu.matmul %7, %8, %cst_8 {dimension_numbers = #tpu.dot_dimension_numbers<[1], [0], [0], [1], [0, 0, 1, 1], [], []>, precision = #tpu.contract_precision<fp32>} : vector<8x128xf32>, vector<128x64xf32>, vector<8x64xf32> -> vector<8x64xf32>
    %c0_9 = arith.constant 0 : index
    %c0_10 = arith.constant 0 : index
    %10 = vector.load %arg5[%c0_9, %c0_10] : memref<1x64xf32, #tpu.memory_space<vmem>>, vector<1x64xf32>
    %11 = vector.broadcast %10 : vector<1x64xf32> to vector<8x64xf32>
    %12 = arith.addf %9, %11 : vector<8x64xf32>
    %cst_11 = arith.constant 0.000000e+00 : f32
    %13 = vector.broadcast %cst_11 : f32 to vector<8x64xf32>
    %14 = arith.maximumf %12, %13 : vector<8x64xf32>
    %c0_12 = arith.constant 0 : index
    %c0_13 = arith.constant 0 : index
    %15 = vector.load %arg6[%c0_12, %c0_13] : memref<64x2xf32, #tpu.memory_space<vmem>>, vector<64x2xf32>
    %cst_14 = arith.constant dense<0.000000e+00> : vector<8x2xf32>
    %16 = tpu.matmul %14, %15, %cst_14 {dimension_numbers = #tpu.dot_dimension_numbers<[1], [0], [0], [1], [0, 0, 1, 1], [], []>, precision = #tpu.contract_precision<fp32>} : vector<8x64xf32>, vector<64x2xf32>, vector<8x2xf32> -> vector<8x2xf32>
    %c0_15 = arith.constant 0 : index
    %c0_16 = arith.constant 0 : index
    %17 = vector.load %arg7[%c0_15, %c0_16] : memref<1x2xf32, #tpu.memory_space<vmem>>, vector<1x2xf32>
    %18 = vector.broadcast %17 : vector<1x2xf32> to vector<8x2xf32>
    %19 = arith.addf %16, %18 : vector<8x2xf32>
    %c0_17 = arith.constant 0 : index
    %c0_18 = arith.constant 0 : index
    %20 = vector.load %arg8[%c0_17, %c0_18] : memref<8x2xf32, #tpu.memory_space<vmem>>, vector<8x2xf32>
    tpu.vector_store %arg8[%c0_17, %c0_18], %19 {strides = array<i32>} : memref<8x2xf32, #tpu.memory_space<vmem>>, vector<8x2xf32>,
    return
  }
  func.func @transform_0(%arg0: i32) -> (i32, i32) {
    %c0_i32 = arith.constant 0 : i32
    %c0_i32_0 = arith.constant 0 : i32
    return %arg0, %c0_i32 : i32, i32
  }
  func.func @transform_1(%arg0: i32) -> (i32, i32) {
    %c0_i32 = arith.constant 0 : i32
    %c0_i32_0 = arith.constant 0 : i32
    %c0_i32_1 = arith.constant 0 : i32
    return %c0_i32, %c0_i32_0 : i32, i32
  }
  func.func @transform_2(%arg0: i32) -> (i32, i32) {
    %c0_i32 = arith.constant 0 : i32
    %c0_i32_0 = arith.constant 0 : i32
    %c0_i32_1 = arith.constant 0 : i32
    return %c0_i32, %c0_i32_0 : i32, i32
  }
  func.func @transform_3(%arg0: i32) -> (i32, i32) {
    %c0_i32 = arith.constant 0 : i32
    %c0_i32_0 = arith.constant 0 : i32
    %c0_i32_1 = arith.constant 0 : i32
    return %c0_i32, %c0_i32_0 : i32, i32
  }
  func.func @transform_4(%arg0: i32) -> (i32, i32) {
    %c0_i32 = arith.constant 0 : i32
    %c0_i32_0 = arith.constant 0 : i32
    %c0_i32_1 = arith.constant 0 : i32
    return %c0_i32, %c0_i32_0 : i32, i32
  }
  func.func @transform_5(%arg0: i32) -> (i32, i32) {
    %c0_i32 = arith.constant 0 : i32
    %c0_i32_0 = arith.constant 0 : i32
    %c0_i32_1 = arith.constant 0 : i32
    return %c0_i32, %c0_i32_0 : i32, i32
  }
  func.func @transform_6(%arg0: i32) -> (i32, i32) {
    %c0_i32 = arith.constant 0 : i32
    %c0_i32_0 = arith.constant 0 : i32
    %c0_i32_1 = arith.constant 0 : i32
    return %c0_i32, %c0_i32_0 : i32, i32
  }
  func.func @transform_7(%arg0: i32) -> (i32, i32) {
    %c0_i32 = arith.constant 0 : i32
    %c0_i32_0 = arith.constant 0 : i32
    return %arg0, %c0_i32 : i32, i32
  }
}

</mosaic_0001>

<llo_original>
// kernel: tpu_custom_call.1
$region0: #{tpu_custom_call.1}
  #allocation0 [shape = 'u32[]', space=smem, size = 0x4, offset = 0x4, fixed_abs, tag = 'smem constant byte address 0x4 - core index']
  #allocation1 [shape = 'u32[72,128]{1,0:T(1,128)}', space=vmem, size = 0x9000, scoped, tag = 'internal scratch']
  %s0 = inlined_call_operand.vmem [shape: f32[8,32], index: 0, kind: input, shape index: {}]
  %s1 = inlined_call_operand.vmem [shape: f32[32,128], index: 1, kind: input, shape index: {}]
  %s2 = inlined_call_operand.vmem [shape: f32[1,128], index: 2, kind: input, shape index: {}]
  %s3 = inlined_call_operand.vmem [shape: f32[128,64], index: 3, kind: input, shape index: {}]
  %s4 = inlined_call_operand.vmem [shape: f32[1,64], index: 4, kind: input, shape index: {}]
  %s5 = inlined_call_operand.vmem [shape: f32[64,2], index: 5, kind: input, shape index: {}]
  %s6 = inlined_call_operand.vmem [shape: f32[1,2], index: 6, kind: input, shape index: {}]
  %s7 = inlined_call_operand.vmem [shape: f32[8,2], index: 7, kind: output, shape index: {}]
  %s8 = sld [smem:[#allocation0]]
  $region38: #{tpu_custom_call.1} parent=0
    _
  %s10 = ssub.s32 1, %s8
  %s11 = scalar_select 0, %s10, %s8
  // Predicated region
  $region2: #{tpu_custom_call.1} parent=0 // pred_check
    _
  $region3: #{tpu_custom_call.1} parent=0 // pred_check_branch
    %13 = sbr.rel (0) target = $region5
  $region4: #{tpu_custom_call.1} parent=0 // pred_region
    _
  $region5: #{tpu_custom_call.1} parent=0 // pred_fallthru
    _
  // Predicated region
  $region6: #{tpu_custom_call.1} parent=0 // pred_check
    _
  $region7: #{tpu_custom_call.1} parent=0 // pred_check_branch
    %15 = sbr.rel (0) target = $region9
  $region8: #{tpu_custom_call.1} parent=0 // pred_region
    _
  $region9: #{tpu_custom_call.1} parent=0 // pred_fallthru
    _
  // Predicated region
  $region10: #{tpu_custom_call.1} parent=0 // pred_check
    _
  $region11: #{tpu_custom_call.1} parent=0 // pred_check_branch
    %17 = sbr.rel (0) target = $region13
  $region12: #{tpu_custom_call.1} parent=0 // pred_region
    _
  $region13: #{tpu_custom_call.1} parent=0 // pred_fallthru
    _
  // Predicated region
  $region14: #{tpu_custom_call.1} parent=0 // pred_check
    _
  $region15: #{tpu_custom_call.1} parent=0 // pred_check_branch
    %19 = sbr.rel (0) target = $region17
  $region16: #{tpu_custom_call.1} parent=0 // pred_region
    _
  $region17: #{tpu_custom_call.1} parent=0 // pred_fallthru
    _
  // Predicated region
  $region18: #{tpu_custom_call.1} parent=0 // pred_check
    _
  $region19: #{tpu_custom_call.1} parent=0 // pred_check_branch
    %21 = sbr.rel (0) target = $region21
  $region20: #{tpu_custom_call.1} parent=0 // pred_region
    _
  $region21: #{tpu_custom_call.1} parent=0 // pred_fallthru
    _
  // Predicated region
  $region22: #{tpu_custom_call.1} parent=0 // pred_check
    _
  $region23: #{tpu_custom_call.1} parent=0 // pred_check_branch
    %23 = sbr.rel (0) target = $region25
  $region24: #{tpu_custom_call.1} parent=0 // pred_region
    _
  $region25: #{tpu_custom_call.1} parent=0 // pred_fallthru
    _
  // Predicated region
  $region26: #{tpu_custom_call.1} parent=0 // pred_check
    _
  $region27: #{tpu_custom_call.1} parent=0 // pred_check_branch
    %25 = sbr.rel (0) target = $region29
  $region28: #{tpu_custom_call.1} parent=0 // pred_region
    _
  $region29: #{tpu_custom_call.1} parent=0 // pred_fallthru
    _
  %v26 = vld [vmem:[%s0] sm:$0xff]
  %v27 = vld [vmem:[%s1] sm:$0xff]
  %v28 = vld [vmem:[%s1 + $0x8] sm:$0xff]
  %v29 = vld [vmem:[%s1 + $0x10] sm:$0xff]
  %v30 = vld [vmem:[%s1 + $0x18] sm:$0xff]
  %v31 = vld [vmem:[%s2] sm:$0x1]
  %v33 = vperm.slane %v31, 0
  %vm35 = vcmask 261120
  %v37 = vsel %vm35, %v26, 0
  %39 = vmatpush.msra.mxu0 0.0
  %40 = vmatpush.msra.mxu0 0.0
  %41 = vmatpush.msra.mxu0 0.0
  %42 = vmatpush.msra.mxu0 0.0
  %43 = vmatpush.msra.mxu0 0.0
  %44 = vmatpush.msra.mxu0 0.0
  %45 = vmatpush.msra.mxu0 0.0
  %46 = vmatpush.msra.mxu0 0.0
  %47 = vmatpush.msra.mxu0 0.0
  %48 = vmatpush.msra.mxu0 0.0
  %49 = vmatpush.msra.mxu0 0.0
  %50 = vmatpush.msra.mxu0 0.0
  %v51 = vand.u32 %v30, 4294901760
  %52 = vmatpush.msra.mxu0 %v51
  %v53 = vand.u32 %v29, 4294901760
  %54 = vmatpush.msra.mxu0 %v53
  %v55 = vand.u32 %v28, 4294901760
  %56 = vmatpush.msra.mxu0 %v55
  %v57 = vand.u32 %v27, 4294901760
  %58 = vmatpush.msra.mxu0 %v57
  %v59 = vand.u32 %v37, 4294901760
  %v60 = vsub.f32 %v37, %v59
  %v61 = vand.u32 %v60, 4294901760
  %v62 = vsub.f32 %v60, %v61
  %v63 = vand.u32 %v62, 4294901760
  %64 = vmatmul.f32.gmra.mxu0 %v63
  %v65 = vpop.f32.mrf.mxu0
  %v66 = vadd.f32 %v33, %v65
  %67 = vdwg.mxu0
  %68 = vmatpush.msra.mxu0 0.0
  %69 = vmatpush.msra.mxu0 0.0
  %70 = vmatpush.msra.mxu0 0.0
  %71 = vmatpush.msra.mxu0 0.0
  %72 = vmatpush.msra.mxu0 0.0
  %73 = vmatpush.msra.mxu0 0.0
  %74 = vmatpush.msra.mxu0 0.0
  %75 = vmatpush.msra.mxu0 0.0
  %76 = vmatpush.msra.mxu0 0.0
  %77 = vmatpush.msra.mxu0 0.0
  %78 = vmatpush.msra.mxu0 0.0
  %79 = vmatpush.msra.mxu0 0.0
  %v80 = vand.u32 %v30, 4294901760
  %v81 = vsub.f32 %v30, %v80
  %v82 = vand.u32 %v81, 4294901760
  %v83 = vsub.f32 %v81, %v82
  %v84 = vand.u32 %v83, 4294901760
  %85 = vmatpush.msra.mxu0 %v84
  %v86 = vand.u32 %v29, 4294901760
  %v87 = vsub.f32 %v29, %v86
  %v88 = vand.u32 %v87, 4294901760
  %v89 = vsub.f32 %v87, %v88
  %v90 = vand.u32 %v89, 4294901760
  %91 = vmatpush.msra.mxu0 %v90
  %v92 = vand.u32 %v28, 4294901760
  %v93 = vsub.f32 %v28, %v92
  %v94 = vand.u32 %v93, 4294901760
  %v95 = vsub.f32 %v93, %v94
  %v96 = vand.u32 %v95, 4294901760
  %97 = vmatpush.msra.mxu0 %v96
  %v98 = vand.u32 %v27, 4294901760
  %v99 = vsub.f32 %v27, %v98
  %v100 = vand.u32 %v99, 4294901760
  %v101 = vsub.f32 %v99, %v100
  %v102 = vand.u32 %v101, 4294901760
  %103 = vmatpush.msra.mxu0 %v102
  %v104 = vand.u32 %v37, 4294901760
  %105 = vmatmul.f32.gmra.mxu0 %v104
  %v106 = vpop.f32.mrf.mxu0
  %v107 = vadd.f32 %v66, %v106
  %108 = vdwg.mxu0
  %109 = vmatpush.msra.mxu0 0.0
  %110 = vmatpush.msra.mxu0 0.0
  %111 = vmatpush.msra.mxu0 0.0
  %112 = vmatpush.msra.mxu0 0.0
  %113 = vmatpush.msra.mxu0 0.0
  %114 = vmatpush.msra.mxu0 0.0
  %115 = vmatpush.msra.mxu0 0.0
  %116 = vmatpush.msra.mxu0 0.0
  %117 = vmatpush.msra.mxu0 0.0
  %118 = vmatpush.msra.mxu0 0.0
  %119 = vmatpush.msra.mxu0 0.0
  %120 = vmatpush.msra.mxu0 0.0
  %v121 = vand.u32 %v30, 4294901760
  %v122 = vsub.f32 %v30, %v121
  %123 = vmatpush.msra.mxu0 %v122
  %v124 = vand.u32 %v29, 4294901760
  %v125 = vsub.f32 %v29, %v124
  %126 = vmatpush.msra.mxu0 %v125
  %v127 = vand.u32 %v28, 4294901760
  %v128 = vsub.f32 %v28, %v127
  %129 = vmatpush.msra.mxu0 %v128
  %v130 = vand.u32 %v27, 4294901760
  %v131 = vsub.f32 %v27, %v130
  %132 = vmatpush.msra.mxu0 %v131
  %v133 = vand.u32 %v37, 4294901760
  %v134 = vsub.f32 %v37, %v133
  %135 = vmatmul.f32.gmra.mxu0 %v134
  %v136 = vpop.f32.mrf.mxu0
  %v137 = vadd.f32 %v107, %v136
  %138 = vdwg.mxu0
  %139 = vmatpush.msra.mxu0 0.0
  %140 = vmatpush.msra.mxu0 0.0
  %141 = vmatpush.msra.mxu0 0.0
  %142 = vmatpush.msra.mxu0 0.0
  %143 = vmatpush.msra.mxu0 0.0
  %144 = vmatpush.msra.mxu0 0.0
  %145 = vmatpush.msra.mxu0 0.0
  %146 = vmatpush.msra.mxu0 0.0
  %147 = vmatpush.msra.mxu0 0.0
  %148 = vmatpush.msra.mxu0 0.0
  %149 = vmatpush.msra.mxu0 0.0
  %150 = vmatpush.msra.mxu0 0.0
  %v151 = vand.u32 %v30, 4294901760
  %152 = vmatpush.msra.mxu0 %v151
  %v153 = vand.u32 %v29, 4294901760
  %154 = vmatpush.msra.mxu0 %v153
  %v155 = vand.u32 %v28, 4294901760
  %156 = vmatpush.msra.mxu0 %v155
  %v157 = vand.u32 %v27, 4294901760
  %158 = vmatpush.msra.mxu0 %v157
  %v159 = vand.u32 %v37, 4294901760
  %v160 = vsub.f32 %v37, %v159
  %v161 = vand.u32 %v160, 4294901760
  %162 = vmatmul.f32.gmra.mxu0 %v161
  %v163 = vpop.f32.mrf.mxu0
  %v164 = vadd.f32 %v137, %v163
  %165 = vdwg.mxu0
  %166 = vmatpush.msra.mxu0 0.0
  %167 = vmatpush.msra.mxu0 0.0
  %168 = vmatpush.msra.mxu0 0.0
  %169 = vmatpush.msra.mxu0 0.0
  %170 = vmatpush.msra.mxu0 0.0
  %171 = vmatpush.msra.mxu0 0.0
  %172 = vmatpush.msra.mxu0 0.0
  %173 = vmatpush.msra.mxu0 0.0
  %174 = vmatpush.msra.mxu0 0.0
  %175 = vmatpush.msra.mxu0 0.0
  %176 = vmatpush.msra.mxu0 0.0
  %177 = vmatpush.msra.mxu0 0.0
  %v178 = vand.u32 %v30, 4294901760
  %v179 = vsub.f32 %v30, %v178
  %v180 = vand.u32 %v179, 4294901760
  %181 = vmatpush.msra.mxu0 %v180
  %v182 = vand.u32 %v29, 4294901760
  %v183 = vsub.f32 %v29, %v182
  %v184 = vand.u32 %v183, 4294901760
  %185 = vmatpush.msra.mxu0 %v184
  %v186 = vand.u32 %v28, 4294901760
  %v187 = vsub.f32 %v28, %v186
  %v188 = vand.u32 %v187, 4294901760
  %189 = vmatpush.msra.mxu0 %v188
  %v190 = vand.u32 %v27, 4294901760
  %v191 = vsub.f32 %v27, %v190
  %v192 = vand.u32 %v191, 4294901760
  %193 = vmatpush.msra.mxu0 %v192
  %v194 = vand.u32 %v37, 4294901760
  %195 = vmatmul.f32.gmra.mxu0 %v194
  %v196 = vpop.f32.mrf.mxu0
  %v197 = vadd.f32 %v164, %v196
  %198 = vdwg.mxu0
  %199 = vmatpush.msra.mxu0 0.0
  %200 = vmatpush.msra.mxu0 0.0
  %201 = vmatpush.msra.mxu0 0.0
  %202 = vmatpush.msra.mxu0 0.0
  %203 = vmatpush.msra.mxu0 0.0
  %204 = vmatpush.msra.mxu0 0.0
  %205 = vmatpush.msra.mxu0 0.0
  %206 = vmatpush.msra.mxu0 0.0
  %207 = vmatpush.msra.mxu0 0.0
  %208 = vmatpush.msra.mxu0 0.0
  %209 = vmatpush.msra.mxu0 0.0
  %210 = vmatpush.msra.mxu0 0.0
  %v211 = vand.u32 %v30, 4294901760
  %212 = vmatpush.msra.mxu0 %v211
  %v213 = vand.u32 %v29, 4294901760
  %214 = vmatpush.msra.mxu0 %v213
  %v215 = vand.u32 %v28, 4294901760
  %216 = vmatpush.msra.mxu0 %v215
  %v217 = vand.u32 %v27, 4294901760
  %218 = vmatpush.msra.mxu0 %v217
  %v219 = vand.u32 %v37, 4294901760
  %220 = vmatmul.f32.gmra.mxu0 %v219
  %v221 = vpop.f32.mrf.mxu0
  %v222 = vadd.f32 %v197, %v221
  %223 = vdwg.mxu0
  %v224 = vmax.f32 %v222, 0.0
  %v225 = vld [vmem:[%s3] sm:$0xff]
  %v226 = vld [vmem:[%s3 + $0x8] sm:$0xff]
  %v227 = vld [vmem:[%s3 + $0x10] sm:$0xff]
  %v228 = vld [vmem:[%s3 + $0x18] sm:$0xff]
  %v229 = vld [vmem:[%s3 + $0x20] sm:$0xff]
  %v230 = vld [vmem:[%s3 + $0x28] sm:$0xff]
  %v231 = vld [vmem:[%s3 + $0x30] sm:$0xff]
  %v232 = vld [vmem:[%s3 + $0x38] sm:$0xff]
  %v233 = vld [vmem:[%s3 + $0x40] sm:$0xff]
  %v234 = vld [vmem:[%s3 + $0x48] sm:$0xff]
  %v235 = vld [vmem:[%s3 + $0x50] sm:$0xff]
  %v236 = vld [vmem:[%s3 + $0x58] sm:$0xff]
  %v237 = vld [vmem:[%s3 + $0x60] sm:$0xff]
  %v238 = vld [vmem:[%s3 + $0x68] sm:$0xff]
  %v239 = vld [vmem:[%s3 + $0x70] sm:$0xff]
  %v240 = vld [vmem:[%s3 + $0x78] sm:$0xff]
  %v241 = vld [vmem:[%s4] sm:$0x1]
  %v243 = vperm.slane %v241, 0
  %v245 = vand.u32 %v240, 4294901760
  %246 = vmatpush.msra.mxu0 %v245
  %v247 = vand.u32 %v239, 4294901760
  %248 = vmatpush.msra.mxu0 %v247
  %v249 = vand.u32 %v238, 4294901760
  %250 = vmatpush.msra.mxu0 %v249
  %v251 = vand.u32 %v237, 4294901760
  %252 = vmatpush.msra.mxu0 %v251
  %v253 = vand.u32 %v236, 4294901760
  %254 = vmatpush.msra.mxu0 %v253
  %v255 = vand.u32 %v235, 4294901760
  %256 = vmatpush.msra.mxu0 %v255
  %v257 = vand.u32 %v234, 4294901760
  %258 = vmatpush.msra.mxu0 %v257
  %v259 = vand.u32 %v233, 4294901760
  %260 = vmatpush.msra.mxu0 %v259
  %v261 = vand.u32 %v232, 4294901760
  %262 = vmatpush.msra.mxu0 %v261
  %v263 = vand.u32 %v231, 4294901760
  %264 = vmatpush.msra.mxu0 %v263
  %v265 = vand.u32 %v230, 4294901760
  %266 = vmatpush.msra.mxu0 %v265
  %v267 = vand.u32 %v229, 4294901760
  %268 = vmatpush.msra.mxu0 %v267
  %v269 = vand.u32 %v228, 4294901760
  %270 = vmatpush.msra.mxu0 %v269
  %v271 = vand.u32 %v227, 4294901760
  %272 = vmatpush.msra.mxu0 %v271
  %v273 = vand.u32 %v226, 4294901760
  %274 = vmatpush.msra.mxu0 %v273
  %v275 = vand.u32 %v225, 4294901760
  %276 = vmatpush.msra.mxu0 %v275
  %v277 = vand.u32 %v224, 4294901760
  %v278 = vsub.f32 %v224, %v277
  %v279 = vand.u32 %v278, 4294901760
  %v280 = vsub.f32 %v278, %v279
  %v281 = vand.u32 %v280, 4294901760
  %282 = vmatmul.f32.gmra.mxu0 %v281
  %v283 = vpop.f32.mrf.mxu0
  %v284 = vadd.f32 %v243, %v283
  %285 = vdwg.mxu0
  %v286 = vand.u32 %v240, 4294901760
  %v287 = vsub.f32 %v240, %v286
  %v288 = vand.u32 %v287, 4294901760
  %v289 = vsub.f32 %v287, %v288
  %v290 = vand.u32 %v289, 4294901760
  %291 = vmatpush.msra.mxu0 %v290
  %v292 = vand.u32 %v239, 4294901760
  %v293 = vsub.f32 %v239, %v292
  %v294 = vand.u32 %v293, 4294901760
  %v295 = vsub.f32 %v293, %v294
  %v296 = vand.u32 %v295, 4294901760
  %297 = vmatpush.msra.mxu0 %v296
  %v298 = vand.u32 %v238, 4294901760
  %v299 = vsub.f32 %v238, %v298
  %v300 = vand.u32 %v299, 4294901760
  %v301 = vsub.f32 %v299, %v300
  %v302 = vand.u32 %v301, 4294901760
  %303 = vmatpush.msra.mxu0 %v302
  %v304 = vand.u32 %v237, 4294901760
  %v305 = vsub.f32 %v237, %v304
  %v306 = vand.u32 %v305, 4294901760
  %v307 = vsub.f32 %v305, %v306
  %v308 = vand.u32 %v307, 4294901760
  %309 = vmatpush.msra.mxu0 %v308
  %v310 = vand.u32 %v236, 4294901760
  %v311 = vsub.f32 %v236, %v310
  %v312 = vand.u32 %v311, 4294901760
  %v313 = vsub.f32 %v311, %v312
  %v314 = vand.u32 %v313, 4294901760
  %315 = vmatpush.msra.mxu0 %v314
  %v316 = vand.u32 %v235, 4294901760
  %v317 = vsub.f32 %v235, %v316
  %v318 = vand.u32 %v317, 4294901760
  %v319 = vsub.f32 %v317, %v318
  %v320 = vand.u32 %v319, 4294901760
  %321 = vmatpush.msra.mxu0 %v320
  %v322 = vand.u32 %v234, 4294901760
  %v323 = vsub.f32 %v234, %v322
  %v324 = vand.u32 %v323, 4294901760
  %v325 = vsub.f32 %v323, %v324
  %v326 = vand.u32 %v325, 4294901760
  %327 = vmatpush.msra.mxu0 %v326
  %v328 = vand.u32 %v233, 4294901760
  %v329 = vsub.f32 %v233, %v328
  %v330 = vand.u32 %v329, 4294901760
  %v331 = vsub.f32 %v329, %v330
  %v332 = vand.u32 %v331, 4294901760
  %333 = vmatpush.msra.mxu0 %v332
  %v334 = vand.u32 %v232, 4294901760
  %v335 = vsub.f32 %v232, %v334
  %v336 = vand.u32 %v335, 4294901760
  %v337 = vsub.f32 %v335, %v336
  %v338 = vand.u32 %v337, 4294901760
  %339 = vmatpush.msra.mxu0 %v338
  %v340 = vand.u32 %v231, 4294901760
  %v341 = vsub.f32 %v231, %v340
  %v342 = vand.u32 %v341, 4294901760
  %v343 = vsub.f32 %v341, %v342
  %v344 = vand.u32 %v343, 4294901760
  %345 = vmatpush.msra.mxu0 %v344
  %v346 = vand.u32 %v230, 4294901760
  %v347 = vsub.f32 %v230, %v346
  %v348 = vand.u32 %v347, 4294901760
  %v349 = vsub.f32 %v347, %v348
  %v350 = vand.u32 %v349, 4294901760
  %351 = vmatpush.msra.mxu0 %v350
  %v352 = vand.u32 %v229, 4294901760
  %v353 = vsub.f32 %v229, %v352
  %v354 = vand.u32 %v353, 4294901760
  %v355 = vsub.f32 %v353, %v354
  %v356 = vand.u32 %v355, 4294901760
  %357 = vmatpush.msra.mxu0 %v356
  %v358 = vand.u32 %v228, 4294901760
  %v359 = vsub.f32 %v228, %v358
  %v360 = vand.u32 %v359, 4294901760
  %v361 = vsub.f32 %v359, %v360
  %v362 = vand.u32 %v361, 4294901760
  %363 = vmatpush.msra.mxu0 %v362
  %v364 = vand.u32 %v227, 4294901760
  %v365 = vsub.f32 %v227, %v364
  %v366 = vand.u32 %v365, 4294901760
  %v367 = vsub.f32 %v365, %v366
  %v368 = vand.u32 %v367, 4294901760
  %369 = vmatpush.msra.mxu0 %v368
  %v370 = vand.u32 %v226, 4294901760
  %v371 = vsub.f32 %v226, %v370
  %v372 = vand.u32 %v371, 4294901760
  %v373 = vsub.f32 %v371, %v372
  %v374 = vand.u32 %v373, 4294901760
  %375 = vmatpush.msra.mxu0 %v374
  %v376 = vand.u32 %v225, 4294901760
  %v377 = vsub.f32 %v225, %v376
  %v378 = vand.u32 %v377, 4294901760
  %v379 = vsub.f32 %v377, %v378
  %v380 = vand.u32 %v379, 4294901760
  %381 = vmatpush.msra.mxu0 %v380
  %v382 = vand.u32 %v224, 4294901760
  %383 = vmatmul.f32.gmra.mxu0 %v382
  %v384 = vpop.f32.mrf.mxu0
  %v385 = vadd.f32 %v284, %v384
  %386 = vdwg.mxu0
  %v387 = vand.u32 %v240, 4294901760
  %v388 = vsub.f32 %v240, %v387
  %389 = vmatpush.msra.mxu0 %v388
  %v390 = vand.u32 %v239, 4294901760
  %v391 = vsub.f32 %v239, %v390
  %392 = vmatpush.msra.mxu0 %v391
  %v393 = vand.u32 %v238, 4294901760
  %v394 = vsub.f32 %v238, %v393
  %395 = vmatpush.msra.mxu0 %v394
  %v396 = vand.u32 %v237, 4294901760
  %v397 = vsub.f32 %v237, %v396
  %398 = vmatpush.msra.mxu0 %v397
  %v399 = vand.u32 %v236, 4294901760
  %v400 = vsub.f32 %v236, %v399
  %401 = vmatpush.msra.mxu0 %v400
  %v402 = vand.u32 %v235, 4294901760
  %v403 = vsub.f32 %v235, %v402
  %404 = vmatpush.msra.mxu0 %v403
  %v405 = vand.u32 %v234, 4294901760
  %v406 = vsub.f32 %v234, %v405
  %407 = vmatpush.msra.mxu0 %v406
  %v408 = vand.u32 %v233, 4294901760
  %v409 = vsub.f32 %v233, %v408
  %410 = vmatpush.msra.mxu0 %v409
  %v411 = vand.u32 %v232, 4294901760
  %v412 = vsub.f32 %v232, %v411
  %413 = vmatpush.msra.mxu0 %v412
  %v414 = vand.u32 %v231, 4294901760
  %v415 = vsub.f32 %v231, %v414
  %416 = vmatpush.msra.mxu0 %v415
  %v417 = vand.u32 %v230, 4294901760
  %v418 = vsub.f32 %v230, %v417
  %419 = vmatpush.msra.mxu0 %v418
  %v420 = vand.u32 %v229, 4294901760
  %v421 = vsub.f32 %v229, %v420
  %422 = vmatpush.msra.mxu0 %v421
  %v423 = vand.u32 %v228, 4294901760
  %v424 = vsub.f32 %v228, %v423
  %425 = vmatpush.msra.mxu0 %v424
  %v426 = vand.u32 %v227, 4294901760
  %v427 = vsub.f32 %v227, %v426
  %428 = vmatpush.msra.mxu0 %v427
  %v429 = vand.u32 %v226, 4294901760
  %v430 = vsub.f32 %v226, %v429
  %431 = vmatpush.msra.mxu0 %v430
  %v432 = vand.u32 %v225, 4294901760
  %v433 = vsub.f32 %v225, %v432
  %434 = vmatpush.msra.mxu0 %v433
  %v435 = vand.u32 %v224, 4294901760
  %v436 = vsub.f32 %v224, %v435
  %437 = vmatmul.f32.gmra.mxu0 %v436
  %v438 = vpop.f32.mrf.mxu0
  %v439 = vadd.f32 %v385, %v438
  %440 = vdwg.mxu0
  %v441 = vand.u32 %v240, 4294901760
  %442 = vmatpush.msra.mxu0 %v441
  %v443 = vand.u32 %v239, 4294901760
  %444 = vmatpush.msra.mxu0 %v443
  %v445 = vand.u32 %v238, 4294901760
  %446 = vmatpush.msra.mxu0 %v445
  %v447 = vand.u32 %v237, 4294901760
  %448 = vmatpush.msra.mxu0 %v447
  %v449 = vand.u32 %v236, 4294901760
  %450 = vmatpush.msra.mxu0 %v449
  %v451 = vand.u32 %v235, 4294901760
  %452 = vmatpush.msra.mxu0 %v451
  %v453 = vand.u32 %v234, 4294901760
  %454 = vmatpush.msra.mxu0 %v453
  %v455 = vand.u32 %v233, 4294901760
  %456 = vmatpush.msra.mxu0 %v455
  %v457 = vand.u32 %v232, 4294901760
  %458 = vmatpush.msra.mxu0 %v457
  %v459 = vand.u32 %v231, 4294901760
  %460 = vmatpush.msra.mxu0 %v459
  %v461 = vand.u32 %v230, 4294901760
  %462 = vmatpush.msra.mxu0 %v461
  %v463 = vand.u32 %v229, 4294901760
  %464 = vmatpush.msra.mxu0 %v463
  %v465 = vand.u32 %v228, 4294901760
  %466 = vmatpush.msra.mxu0 %v465
  %v467 = vand.u32 %v227, 4294901760
  %468 = vmatpush.msra.mxu0 %v467
  %v469 = vand.u32 %v226, 4294901760
  %470 = vmatpush.msra.mxu0 %v469
  %v471 = vand.u32 %v225, 4294901760
  %472 = vmatpush.msra.mxu0 %v471
  %v473 = vand.u32 %v224, 4294901760
  %v474 = vsub.f32 %v224, %v473
  %v475 = vand.u32 %v474, 4294901760
  %476 = vmatmul.f32.gmra.mxu0 %v475
  %v477 = vpop.f32.mrf.mxu0
  %v478 = vadd.f32 %v439, %v477
  %479 = vdwg.mxu0
  %v480 = vand.u32 %v240, 4294901760
  %v481 = vsub.f32 %v240, %v480
  %v482 = vand.u32 %v481, 4294901760
  %483 = vmatpush.msra.mxu0 %v482
  %v484 = vand.u32 %v239, 4294901760
  %v485 = vsub.f32 %v239, %v484
  %v486 = vand.u32 %v485, 4294901760
  %487 = vmatpush.msra.mxu0 %v486
  %v488 = vand.u32 %v238, 4294901760
  %v489 = vsub.f32 %v238, %v488
  %v490 = vand.u32 %v489, 4294901760
  %491 = vmatpush.msra.mxu0 %v490
  %v492 = vand.u32 %v237, 4294901760
  %v493 = vsub.f32 %v237, %v492
  %v494 = vand.u32 %v493, 4294901760
  %495 = vmatpush.msra.mxu0 %v494
  %v496 = vand.u32 %v236, 4294901760
  %v497 = vsub.f32 %v236, %v496
  %v498 = vand.u32 %v497, 4294901760
  %499 = vmatpush.msra.mxu0 %v498
  %v500 = vand.u32 %v235, 4294901760
  %v501 = vsub.f32 %v235, %v500
  %v502 = vand.u32 %v501, 4294901760
  %503 = vmatpush.msra.mxu0 %v502
  %v504 = vand.u32 %v234, 4294901760
  %v505 = vsub.f32 %v234, %v504
  %v506 = vand.u32 %v505, 4294901760
  %507 = vmatpush.msra.mxu0 %v506
  %v508 = vand.u32 %v233, 4294901760
  %v509 = vsub.f32 %v233, %v508
  %v510 = vand.u32 %v509, 4294901760
  %511 = vmatpush.msra.mxu0 %v510
  %v512 = vand.u32 %v232, 4294901760
  %v513 = vsub.f32 %v232, %v512
  %v514 = vand.u32 %v513, 4294901760
  %515 = vmatpush.msra.mxu0 %v514
  %v516 = vand.u32 %v231, 4294901760
  %v517 = vsub.f32 %v231, %v516
  %v518 = vand.u32 %v517, 4294901760
  %519 = vmatpush.msra.mxu0 %v518
  %v520 = vand.u32 %v230, 4294901760
  %v521 = vsub.f32 %v230, %v520
  %v522 = vand.u32 %v521, 4294901760
  %523 = vmatpush.msra.mxu0 %v522
  %v524 = vand.u32 %v229, 4294901760
  %v525 = vsub.f32 %v229, %v524
  %v526 = vand.u32 %v525, 4294901760
  %527 = vmatpush.msra.mxu0 %v526
  %v528 = vand.u32 %v228, 4294901760
  %v529 = vsub.f32 %v228, %v528
  %v530 = vand.u32 %v529, 4294901760
  %531 = vmatpush.msra.mxu0 %v530
  %v532 = vand.u32 %v227, 4294901760
  %v533 = vsub.f32 %v227, %v532
  %v534 = vand.u32 %v533, 4294901760
  %535 = vmatpush.msra.mxu0 %v534
  %v536 = vand.u32 %v226, 4294901760
  %v537 = vsub.f32 %v226, %v536
  %v538 = vand.u32 %v537, 4294901760
  %539 = vmatpush.msra.mxu0 %v538
  %v540 = vand.u32 %v225, 4294901760
  %v541 = vsub.f32 %v225, %v540
  %v542 = vand.u32 %v541, 4294901760
  %543 = vmatpush.msra.mxu0 %v542
  %v544 = vand.u32 %v224, 4294901760
  %545 = vmatmul.f32.gmra.mxu0 %v544
  %v546 = vpop.f32.mrf.mxu0
  %v547 = vadd.f32 %v478, %v546
  %548 = vdwg.mxu0
  %v549 = vand.u32 %v240, 4294901760
  %550 = vmatpush.msra.mxu0 %v549
  %v551 = vand.u32 %v239, 4294901760
  %552 = vmatpush.msra.mxu0 %v551
  %v553 = vand.u32 %v238, 4294901760
  %554 = vmatpush.msra.mxu0 %v553
  %v555 = vand.u32 %v237, 4294901760
  %556 = vmatpush.msra.mxu0 %v555
  %v557 = vand.u32 %v236, 4294901760
  %558 = vmatpush.msra.mxu0 %v557
  %v559 = vand.u32 %v235, 4294901760
  %560 = vmatpush.msra.mxu0 %v559
  %v561 = vand.u32 %v234, 4294901760
  %562 = vmatpush.msra.mxu0 %v561
  %v563 = vand.u32 %v233, 4294901760
  %564 = vmatpush.msra.mxu0 %v563
  %v565 = vand.u32 %v232, 4294901760
  %566 = vmatpush.msra.mxu0 %v565
  %v567 = vand.u32 %v231, 4294901760
  %568 = vmatpush.msra.mxu0 %v567
  %v569 = vand.u32 %v230, 4294901760
  %570 = vmatpush.msra.mxu0 %v569
  %v571 = vand.u32 %v229, 4294901760
  %572 = vmatpush.msra.mxu0 %v571
  %v573 = vand.u32 %v228, 4294901760
  %574 = vmatpush.msra.mxu0 %v573
  %v575 = vand.u32 %v227, 4294901760
  %576 = vmatpush.msra.mxu0 %v575
  %v577 = vand.u32 %v226, 4294901760
  %578 = vmatpush.msra.mxu0 %v577
  %v579 = vand.u32 %v225, 4294901760
  %580 = vmatpush.msra.mxu0 %v579
  %v581 = vand.u32 %v224, 4294901760
  %582 = vmatmul.f32.gmra.mxu0 %v581
  %v583 = vpop.f32.mrf.mxu0
  %v584 = vadd.f32 %v547, %v583
  %585 = vdwg.mxu0
  %v586 = vmax.f32 %v584, 0.0
  %v587 = vld [vmem:[%s5] sm:$0xff]
  %v588 = vld [vmem:[%s5 + $0x8] sm:$0xff]
  %v589 = vld [vmem:[%s5 + $0x10] sm:$0xff]
  %v590 = vld [vmem:[%s5 + $0x18] sm:$0xff]
  %v591 = vld [vmem:[%s5 + $0x20] sm:$0xff]
  %v592 = vld [vmem:[%s5 + $0x28] sm:$0xff]
  %v593 = vld [vmem:[%s5 + $0x30] sm:$0xff]
  %v594 = vld [vmem:[%s5 + $0x38] sm:$0xff]
  %v595 = vld [vmem:[%s6] sm:$0x1]
  %v597 = vperm.slane %v595, 0
  %vm599 = vcmask 523264
  %v601 = vsel %vm599, %v586, 0
  %603 = vmatpush.msra.mxu0 0.0
  %604 = vmatpush.msra.mxu0 0.0
  %605 = vmatpush.msra.mxu0 0.0
  %606 = vmatpush.msra.mxu0 0.0
  %607 = vmatpush.msra.mxu0 0.0
  %608 = vmatpush.msra.mxu0 0.0
  %609 = vmatpush.msra.mxu0 0.0
  %610 = vmatpush.msra.mxu0 0.0
  %v611 = vand.u32 %v594, 4294901760
  %612 = vmatpush.msra.mxu0 %v611
  %v613 = vand.u32 %v593, 4294901760
  %614 = vmatpush.msra.mxu0 %v613
  %v615 = vand.u32 %v592, 4294901760
  %616 = vmatpush.msra.mxu0 %v615
  %v617 = vand.u32 %v591, 4294901760
  %618 = vmatpush.msra.mxu0 %v617
  %v619 = vand.u32 %v590, 4294901760
  %620 = vmatpush.msra.mxu0 %v619
  %v621 = vand.u32 %v589, 4294901760
  %622 = vmatpush.msra.mxu0 %v621
  %v623 = vand.u32 %v588, 4294901760
  %624 = vmatpush.msra.mxu0 %v623
  %v625 = vand.u32 %v587, 4294901760
  %626 = vmatpush.msra.mxu0 %v625
  %v627 = vand.u32 %v601, 4294901760
  %v628 = vsub.f32 %v601, %v627
  %v629 = vand.u32 %v628, 4294901760
  %v630 = vsub.f32 %v628, %v629
  %v631 = vand.u32 %v630, 4294901760
  %632 = vmatmul.f32.gmra.mxu0 %v631
  %v633 = vpop.f32.mrf.mxu0
  %v634 = vadd.f32 %v597, %v633
  %635 = vdwg.mxu0
  %636 = vmatpush.msra.mxu0 0.0
  %637 = vmatpush.msra.mxu0 0.0
  %638 = vmatpush.msra.mxu0 0.0
  %639 = vmatpush.msra.mxu0 0.0
  %640 = vmatpush.msra.mxu0 0.0
  %641 = vmatpush.msra.mxu0 0.0
  %642 = vmatpush.msra.mxu0 0.0
  %643 = vmatpush.msra.mxu0 0.0
  %v644 = vand.u32 %v594, 4294901760
  %v645 = vsub.f32 %v594, %v644
  %v646 = vand.u32 %v645, 4294901760
  %v647 = vsub.f32 %v645, %v646
  %v648 = vand.u32 %v647, 4294901760
  %649 = vmatpush.msra.mxu0 %v648
  %v650 = vand.u32 %v593, 4294901760
  %v651 = vsub.f32 %v593, %v650
  %v652 = vand.u32 %v651, 4294901760
  %v653 = vsub.f32 %v651, %v652
  %v654 = vand.u32 %v653, 4294901760
  %655 = vmatpush.msra.mxu0 %v654
  %v656 = vand.u32 %v592, 4294901760
  %v657 = vsub.f32 %v592, %v656
  %v658 = vand.u32 %v657, 4294901760
  %v659 = vsub.f32 %v657, %v658
  %v660 = vand.u32 %v659, 4294901760
  %661 = vmatpush.msra.mxu0 %v660
  %v662 = vand.u32 %v591, 4294901760
  %v663 = vsub.f32 %v591, %v662
  %v664 = vand.u32 %v663, 4294901760
  %v665 = vsub.f32 %v663, %v664
  %v666 = vand.u32 %v665, 4294901760
  %667 = vmatpush.msra.mxu0 %v666
  %v668 = vand.u32 %v590, 4294901760
  %v669 = vsub.f32 %v590, %v668
  %v670 = vand.u32 %v669, 4294901760
  %v671 = vsub.f32 %v669, %v670
  %v672 = vand.u32 %v671, 4294901760
  %673 = vmatpush.msra.mxu0 %v672
  %v674 = vand.u32 %v589, 4294901760
  %v675 = vsub.f32 %v589, %v674
  %v676 = vand.u32 %v675, 4294901760
  %v677 = vsub.f32 %v675, %v676
  %v678 = vand.u32 %v677, 4294901760
  %679 = vmatpush.msra.mxu0 %v678
  %v680 = vand.u32 %v588, 4294901760
  %v681 = vsub.f32 %v588, %v680
  %v682 = vand.u32 %v681, 4294901760
  %v683 = vsub.f32 %v681, %v682
  %v684 = vand.u32 %v683, 4294901760
  %685 = vmatpush.msra.mxu0 %v684
  %v686 = vand.u32 %v587, 4294901760
  %v687 = vsub.f32 %v587, %v686
  %v688 = vand.u32 %v687, 4294901760
  %v689 = vsub.f32 %v687, %v688
  %v690 = vand.u32 %v689, 4294901760
  %691 = vmatpush.msra.mxu0 %v690
  %v692 = vand.u32 %v601, 4294901760
  %693 = vmatmul.f32.gmra.mxu0 %v692
  %v694 = vpop.f32.mrf.mxu0
  %v695 = vadd.f32 %v634, %v694
  %696 = vdwg.mxu0
  %697 = vmatpush.msra.mxu0 0.0
  %698 = vmatpush.msra.mxu0 0.0
  %699 = vmatpush.msra.mxu0 0.0
  %700 = vmatpush.msra.mxu0 0.0
  %701 = vmatpush.msra.mxu0 0.0
  %702 = vmatpush.msra.mxu0 0.0
  %703 = vmatpush.msra.mxu0 0.0
  %704 = vmatpush.msra.mxu0 0.0
  %v705 = vand.u32 %v594, 4294901760
  %v706 = vsub.f32 %v594, %v705
  %707 = vmatpush.msra.mxu0 %v706
  %v708 = vand.u32 %v593, 4294901760
  %v709 = vsub.f32 %v593, %v708
  %710 = vmatpush.msra.mxu0 %v709
  %v711 = vand.u32 %v592, 4294901760
  %v712 = vsub.f32 %v592, %v711
  %713 = vmatpush.msra.mxu0 %v712
  %v714 = vand.u32 %v591, 4294901760
  %v715 = vsub.f32 %v591, %v714
  %716 = vmatpush.msra.mxu0 %v715
  %v717 = vand.u32 %v590, 4294901760
  %v718 = vsub.f32 %v590, %v717
  %719 = vmatpush.msra.mxu0 %v718
  %v720 = vand.u32 %v589, 4294901760
  %v721 = vsub.f32 %v589, %v720
  %722 = vmatpush.msra.mxu0 %v721
  %v723 = vand.u32 %v588, 4294901760
  %v724 = vsub.f32 %v588, %v723
  %725 = vmatpush.msra.mxu0 %v724
  %v726 = vand.u32 %v587, 4294901760
  %v727 = vsub.f32 %v587, %v726
  %728 = vmatpush.msra.mxu0 %v727
  %v729 = vand.u32 %v601, 4294901760
  %v730 = vsub.f32 %v601, %v729
  %731 = vmatmul.f32.gmra.mxu0 %v730
  %v732 = vpop.f32.mrf.mxu0
  %v733 = vadd.f32 %v695, %v732
  %734 = vdwg.mxu0
  %735 = vmatpush.msra.mxu0 0.0
  %736 = vmatpush.msra.mxu0 0.0
  %737 = vmatpush.msra.mxu0 0.0
  %738 = vmatpush.msra.mxu0 0.0
  %739 = vmatpush.msra.mxu0 0.0
  %740 = vmatpush.msra.mxu0 0.0
  %741 = vmatpush.msra.mxu0 0.0
  %742 = vmatpush.msra.mxu0 0.0
  %v743 = vand.u32 %v594, 4294901760
  %744 = vmatpush.msra.mxu0 %v743
  %v745 = vand.u32 %v593, 4294901760
  %746 = vmatpush.msra.mxu0 %v745
  %v747 = vand.u32 %v592, 4294901760
  %748 = vmatpush.msra.mxu0 %v747
  %v749 = vand.u32 %v591, 4294901760
  %750 = vmatpush.msra.mxu0 %v749
  %v751 = vand.u32 %v590, 4294901760
  %752 = vmatpush.msra.mxu0 %v751
  %v753 = vand.u32 %v589, 4294901760
  %754 = vmatpush.msra.mxu0 %v753
  %v755 = vand.u32 %v588, 4294901760
  %756 = vmatpush.msra.mxu0 %v755
  %v757 = vand.u32 %v587, 4294901760
  %758 = vmatpush.msra.mxu0 %v757
  %v759 = vand.u32 %v601, 4294901760
  %v760 = vsub.f32 %v601, %v759
  %v761 = vand.u32 %v760, 4294901760
  %762 = vmatmul.f32.gmra.mxu0 %v761
  %v763 = vpop.f32.mrf.mxu0
  %v764 = vadd.f32 %v733, %v763
  %765 = vdwg.mxu0
  %766 = vmatpush.msra.mxu0 0.0
  %767 = vmatpush.msra.mxu0 0.0
  %768 = vmatpush.msra.mxu0 0.0
  %769 = vmatpush.msra.mxu0 0.0
  %770 = vmatpush.msra.mxu0 0.0
  %771 = vmatpush.msra.mxu0 0.0
  %772 = vmatpush.msra.mxu0 0.0
  %773 = vmatpush.msra.mxu0 0.0
  %v774 = vand.u32 %v594, 4294901760
  %v775 = vsub.f32 %v594, %v774
  %v776 = vand.u32 %v775, 4294901760
  %777 = vmatpush.msra.mxu0 %v776
  %v778 = vand.u32 %v593, 4294901760
  %v779 = vsub.f32 %v593, %v778
  %v780 = vand.u32 %v779, 4294901760
  %781 = vmatpush.msra.mxu0 %v780
  %v782 = vand.u32 %v592, 4294901760
  %v783 = vsub.f32 %v592, %v782
  %v784 = vand.u32 %v783, 4294901760
  %785 = vmatpush.msra.mxu0 %v784
  %v786 = vand.u32 %v591, 4294901760
  %v787 = vsub.f32 %v591, %v786
  %v788 = vand.u32 %v787, 4294901760
  %789 = vmatpush.msra.mxu0 %v788
  %v790 = vand.u32 %v590, 4294901760
  %v791 = vsub.f32 %v590, %v790
  %v792 = vand.u32 %v791, 4294901760
  %793 = vmatpush.msra.mxu0 %v792
  %v794 = vand.u32 %v589, 4294901760
  %v795 = vsub.f32 %v589, %v794
  %v796 = vand.u32 %v795, 4294901760
  %797 = vmatpush.msra.mxu0 %v796
  %v798 = vand.u32 %v588, 4294901760
  %v799 = vsub.f32 %v588, %v798
  %v800 = vand.u32 %v799, 4294901760
  %801 = vmatpush.msra.mxu0 %v800
  %v802 = vand.u32 %v587, 4294901760
  %v803 = vsub.f32 %v587, %v802
  %v804 = vand.u32 %v803, 4294901760
  %805 = vmatpush.msra.mxu0 %v804
  %v806 = vand.u32 %v601, 4294901760
  %807 = vmatmul.f32.gmra.mxu0 %v806
  %v808 = vpop.f32.mrf.mxu0
  %v809 = vadd.f32 %v764, %v808
  %810 = vdwg.mxu0
  %811 = vmatpush.msra.mxu0 0.0
  %812 = vmatpush.msra.mxu0 0.0
  %813 = vmatpush.msra.mxu0 0.0
  %814 = vmatpush.msra.mxu0 0.0
  %815 = vmatpush.msra.mxu0 0.0
  %816 = vmatpush.msra.mxu0 0.0
  %817 = vmatpush.msra.mxu0 0.0
  %818 = vmatpush.msra.mxu0 0.0
  %v819 = vand.u32 %v594, 4294901760
  %820 = vmatpush.msra.mxu0 %v819
  %v821 = vand.u32 %v593, 4294901760
  %822 = vmatpush.msra.mxu0 %v821
  %v823 = vand.u32 %v592, 4294901760
  %824 = vmatpush.msra.mxu0 %v823
  %v825 = vand.u32 %v591, 4294901760
  %826 = vmatpush.msra.mxu0 %v825
  %v827 = vand.u32 %v590, 4294901760
  %828 = vmatpush.msra.mxu0 %v827
  %v829 = vand.u32 %v589, 4294901760
  %830 = vmatpush.msra.mxu0 %v829
  %v831 = vand.u32 %v588, 4294901760
  %832 = vmatpush.msra.mxu0 %v831
  %v833 = vand.u32 %v587, 4294901760
  %834 = vmatpush.msra.mxu0 %v833
  %v835 = vand.u32 %v601, 4294901760
  %836 = vmatmul.f32.gmra.mxu0 %v835
  %v837 = vpop.f32.mrf.mxu0
  %v838 = vadd.f32 %v809, %v837
  %839 = vdwg.mxu0
  %vm840 = vcmask 15360
  %841 = vst.msk [vmem:[%s7] sm:$0xff] %vm840, %v838
  // Predicated region
  $region30: #{tpu_custom_call.1} parent=0 // pred_check
    _
  $region31: #{tpu_custom_call.1} parent=0 // pred_check_branch
    %843 = sbr.rel (0) target = $region33
  $region32: #{tpu_custom_call.1} parent=0 // pred_region
    _
  $region33: #{tpu_custom_call.1} parent=0 // pred_fallthru
    _
  // Predicated region
  $region34: #{tpu_custom_call.1} parent=0 // pred_check
    _
  $region35: #{tpu_custom_call.1} parent=0 // pred_check_branch
    %845 = sbr.rel (0) target = $region37
  $region36: #{tpu_custom_call.1} parent=0 // pred_region
    _
  $region37: #{tpu_custom_call.1} parent=0 // pred_fallthru
    _

// kernel: tpu_custom_call.1
$region0: #{tpu_custom_call.1}
  #allocation0 [shape = 'u32[]', space=smem, size = 0x4, offset = 0x4, fixed_abs, tag = 'smem constant byte address 0x4 - core index']
  #allocation1 [shape = 'u32[72,128]{1,0:T(1,128)}', space=vmem, size = 0x9000, scoped, tag = 'internal scratch']
  %s0 = inlined_call_operand.vmem [shape: f32[8,32], index: 0, kind: input, shape index: {}]
  %s1 = inlined_call_operand.vmem [shape: f32[32,128], index: 1, kind: input, shape index: {}]
  %s2 = inlined_call_operand.vmem [shape: f32[1,128], index: 2, kind: input, shape index: {}]
  %s3 = inlined_call_operand.vmem [shape: f32[128,64], index: 3, kind: input, shape index: {}]
  %s4 = inlined_call_operand.vmem [shape: f32[1,64], index: 4, kind: input, shape index: {}]
  %s5 = inlined_call_operand.vmem [shape: f32[64,2], index: 5, kind: input, shape index: {}]
  %s6 = inlined_call_operand.vmem [shape: f32[1,2], index: 6, kind: input, shape index: {}]
  %s7 = inlined_call_operand.vmem [shape: f32[8,2], index: 7, kind: output, shape index: {}]
  %s8 = sld [smem:[#allocation0]]
  $region38: #{tpu_custom_call.1} parent=0
    _
  %s10 = ssub.s32 1, %s8
  %s11 = scalar_select 0, %s10, %s8
  // Predicated region
  $region2: #{tpu_custom_call.1} parent=0 // pred_check
    _
  $region3: #{tpu_custom_call.1} parent=0 // pred_check_branch
    %13 = sbr.rel (0) target = $region5
  $region4: #{tpu_custom_call.1} parent=0 // pred_region
    _
  $region5: #{tpu_custom_call.1} parent=0 // pred_fallthru
    _
  // Predicated region
  $region6: #{tpu_custom_call.1} parent=0 // pred_check
    _
  $region7: #{tpu_custom_call.1} parent=0 // pred_check_branch
    %15 = sbr.rel (0) target = $region9
  $region8: #{tpu_custom_call.1} parent=0 // pred_region
    _
  $region9: #{tpu_custom_call.1} parent=0 // pred_fallthru
    _
  // Predicated region
  $region10: #{tpu_custom_call.1} parent=0 // pred_check
    _
  $region11: #{tpu_custom_call.1} parent=0 // pred_check_branch
    %17 = sbr.rel (0) target = $region13
  $region12: #{tpu_custom_call.1} parent=0 // pred_region
    _
  $region13: #{tpu_custom_call.1} parent=0 // pred_fallthru
    _
  // Predicated region
  $region14: #{tpu_custom_call.1} parent=0 // pred_check
    _
  $region15: #{tpu_custom_call.1} parent=0 // pred_check_branch
    %19 = sbr.rel (0) target = $region17
  $region16: #{tpu_custom_call.1} parent=0 // pred_region
    _
  $region17: #{tpu_custom_call.1} parent=0 // pred_fallthru
    _
  // Predicated region
  $region18: #{tpu_custom_call.1} parent=0 // pred_check
    _
  $region19: #{tpu_custom_call.1} parent=0 // pred_check_branch
    %21 = sbr.rel (0) target = $region21
  $region20: #{tpu_custom_call.1} parent=0 // pred_region
    _
  $region21: #{tpu_custom_call.1} parent=0 // pred_fallthru
    _
  // Predicated region
  $region22: #{tpu_custom_call.1} parent=0 // pred_check
    _
  $region23: #{tpu_custom_call.1} parent=0 // pred_check_branch
    %23 = sbr.rel (0) target = $region25
  $region24: #{tpu_custom_call.1} parent=0 // pred_region
    _
  $region25: #{tpu_custom_call.1} parent=0 // pred_fallthru
    _
  // Predicated region
  $region26: #{tpu_custom_call.1} parent=0 // pred_check
    _
  $region27: #{tpu_custom_call.1} parent=0 // pred_check_branch
    %25 = sbr.rel (0) target = $region29
  $region28: #{tpu_custom_call.1} parent=0 // pred_region
    _
  $region29: #{tpu_custom_call.1} parent=0 // pred_fallthru
    _
  %v26 = vld [vmem:[%s0] sm:$0xff]
  %v27 = vld [vmem:[%s1] sm:$0xff]
  %v28 = vld [vmem:[%s1 + $0x8] sm:$0xff]
  %v29 = vld [vmem:[%s1 + $0x10] sm:$0xff]
  %v30 = vld [vmem:[%s1 + $0x18] sm:$0xff]
  %v31 = vld [vmem:[%s2] sm:$0x1]
  %v33 = vperm.slane %v31, 0
  %vm35 = vcmask 261120
  %v37 = vsel %vm35, %v26, 0
  %39 = vmatpush.msra.mxu0 0.0
  %40 = vmatpush.msra.mxu0 0.0
  %41 = vmatpush.msra.mxu0 0.0
  %42 = vmatpush.msra.mxu0 0.0
  %43 = vmatpush.msra.mxu0 0.0
  %44 = vmatpush.msra.mxu0 0.0
  %45 = vmatpush.msra.mxu0 0.0
  %46 = vmatpush.msra.mxu0 0.0
  %47 = vmatpush.msra.mxu0 0.0
  %48 = vmatpush.msra.mxu0 0.0
  %49 = vmatpush.msra.mxu0 0.0
  %50 = vmatpush.msra.mxu0 0.0
  %v51 = vand.u32 %v30, 4294901760
  %52 = vmatpush.msra.mxu0 %v51
  %v53 = vand.u32 %v29, 4294901760
  %54 = vmatpush.msra.mxu0 %v53
  %v55 = vand.u32 %v28, 4294901760
  %56 = vmatpush.msra.mxu0 %v55
  %v57 = vand.u32 %v27, 4294901760
  %58 = vmatpush.msra.mxu0 %v57
  %v59 = vand.u32 %v37, 4294901760
  %v60 = vsub.f32 %v37, %v59
  %v61 = vand.u32 %v60, 4294901760
  %v62 = vsub.f32 %v60, %v61
  %v63 = vand.u32 %v62, 4294901760
  %64 = vmatmul.f32.gmra.mxu0 %v63
  %v65 = vpop.f32.mrf.mxu0
  %v66 = vadd.f32 %v33, %v65
  %67 = vdwg.mxu0
  %68 = vmatpush.msra.mxu0 0.0
  %69 = vmatpush.msra.mxu0 0.0
  %70 = vmatpush.msra.mxu0 0.0
  %71 = vmatpush.msra.mxu0 0.0
  %72 = vmatpush.msra.mxu0 0.0
  %73 = vmatpush.msra.mxu0 0.0
  %74 = vmatpush.msra.mxu0 0.0
  %75 = vmatpush.msra.mxu0 0.0
  %76 = vmatpush.msra.mxu0 0.0
  %77 = vmatpush.msra.mxu0 0.0
  %78 = vmatpush.msra.mxu0 0.0
  %79 = vmatpush.msra.mxu0 0.0
  %v80 = vand.u32 %v30, 4294901760
  %v81 = vsub.f32 %v30, %v80
  %v82 = vand.u32 %v81, 4294901760
  %v83 = vsub.f32 %v81, %v82
  %v84 = vand.u32 %v83, 4294901760
  %85 = vmatpush.msra.mxu0 %v84
  %v86 = vand.u32 %v29, 4294901760
  %v87 = vsub.f32 %v29, %v86
  %v88 = vand.u32 %v87, 4294901760
  %v89 = vsub.f32 %v87, %v88
  %v90 = vand.u32 %v89, 4294901760
  %91 = vmatpush.msra.mxu0 %v90
  %v92 = vand.u32 %v28, 4294901760
  %v93 = vsub.f32 %v28, %v92
  %v94 = vand.u32 %v93, 4294901760
  %v95 = vsub.f32 %v93, %v94
  %v96 = vand.u32 %v95, 4294901760
  %97 = vmatpush.msra.mxu0 %v96
  %v98 = vand.u32 %v27, 4294901760
  %v99 = vsub.f32 %v27, %v98
  %v100 = vand.u32 %v99, 4294901760
  %v101 = vsub.f32 %v99, %v100
  %v102 = vand.u32 %v101, 4294901760
  %103 = vmatpush.msra.mxu0 %v102
  %v104 = vand.u32 %v37, 4294901760
  %105 = vmatmul.f32.gmra.mxu0 %v104
  %v106 = vpop.f32.mrf.mxu0
  %v107 = vadd.f32 %v66, %v106
  %108 = vdwg.mxu0
  %109 = vmatpush.msra.mxu0 0.0
  %110 = vmatpush.msra.mxu0 0.0
  %111 = vmatpush.msra.mxu0 0.0
  %112 = vmatpush.msra.mxu0 0.0
  %113 = vmatpush.msra.mxu0 0.0
  %114 = vmatpush.msra.mxu0 0.0
  %115 = vmatpush.msra.mxu0 0.0
  %116 = vmatpush.msra.mxu0 0.0
  %117 = vmatpush.msra.mxu0 0.0
  %118 = vmatpush.msra.mxu0 0.0
  %119 = vmatpush.msra.mxu0 0.0
  %120 = vmatpush.msra.mxu0 0.0
  %v121 = vand.u32 %v30, 4294901760
  %v122 = vsub.f32 %v30, %v121
  %123 = vmatpush.msra.mxu0 %v122
  %v124 = vand.u32 %v29, 4294901760
  %v125 = vsub.f32 %v29, %v124
  %126 = vmatpush.msra.mxu0 %v125
  %v127 = vand.u32 %v28, 4294901760
  %v128 = vsub.f32 %v28, %v127
  %129 = vmatpush.msra.mxu0 %v128
  %v130 = vand.u32 %v27, 4294901760
  %v131 = vsub.f32 %v27, %v130
  %132 = vmatpush.msra.mxu0 %v131
  %v133 = vand.u32 %v37, 4294901760
  %v134 = vsub.f32 %v37, %v133
  %135 = vmatmul.f32.gmra.mxu0 %v134
  %v136 = vpop.f32.mrf.mxu0
  %v137 = vadd.f32 %v107, %v136
  %138 = vdwg.mxu0
  %139 = vmatpush.msra.mxu0 0.0
  %140 = vmatpush.msra.mxu0 0.0
  %141 = vmatpush.msra.mxu0 0.0
  %142 = vmatpush.msra.mxu0 0.0
  %143 = vmatpush.msra.mxu0 0.0
  %144 = vmatpush.msra.mxu0 0.0
  %145 = vmatpush.msra.mxu0 0.0
  %146 = vmatpush.msra.mxu0 0.0
  %147 = vmatpush.msra.mxu0 0.0
  %148 = vmatpush.msra.mxu0 0.0
  %149 = vmatpush.msra.mxu0 0.0
  %150 = vmatpush.msra.mxu0 0.0
  %v151 = vand.u32 %v30, 4294901760
  %152 = vmatpush.msra.mxu0 %v151
  %v153 = vand.u32 %v29, 4294901760
  %154 = vmatpush.msra.mxu0 %v153
  %v155 = vand.u32 %v28, 4294901760
  %156 = vmatpush.msra.mxu0 %v155
  %v157 = vand.u32 %v27, 4294901760
  %158 = vmatpush.msra.mxu0 %v157
  %v159 = vand.u32 %v37, 4294901760
  %v160 = vsub.f32 %v37, %v159
  %v161 = vand.u32 %v160, 4294901760
  %162 = vmatmul.f32.gmra.mxu0 %v161
  %v163 = vpop.f32.mrf.mxu0
  %v164 = vadd.f32 %v137, %v163
  %165 = vdwg.mxu0
  %166 = vmatpush.msra.mxu0 0.0
  %167 = vmatpush.msra.mxu0 0.0
  %168 = vmatpush.msra.mxu0 0.0
  %169 = vmatpush.msra.mxu0 0.0
  %170 = vmatpush.msra.mxu0 0.0
  %171 = vmatpush.msra.mxu0 0.0
  %172 = vmatpush.msra.mxu0 0.0
  %173 = vmatpush.msra.mxu0 0.0
  %174 = vmatpush.msra.mxu0 0.0
  %175 = vmatpush.msra.mxu0 0.0
  %176 = vmatpush.msra.mxu0 0.0
  %177 = vmatpush.msra.mxu0 0.0
  %v178 = vand.u32 %v30, 4294901760
  %v179 = vsub.f32 %v30, %v178
  %v180 = vand.u32 %v179, 4294901760
  %181 = vmatpush.msra.mxu0 %v180
  %v182 = vand.u32 %v29, 4294901760
  %v183 = vsub.f32 %v29, %v182
  %v184 = vand.u32 %v183, 4294901760
  %185 = vmatpush.msra.mxu0 %v184
  %v186 = vand.u32 %v28, 4294901760
  %v187 = vsub.f32 %v28, %v186
  %v188 = vand.u32 %v187, 4294901760
  %189 = vmatpush.msra.mxu0 %v188
  %v190 = vand.u32 %v27, 4294901760
  %v191 = vsub.f32 %v27, %v190
  %v192 = vand.u32 %v191, 4294901760
  %193 = vmatpush.msra.mxu0 %v192
  %v194 = vand.u32 %v37, 4294901760
  %195 = vmatmul.f32.gmra.mxu0 %v194
  %v196 = vpop.f32.mrf.mxu0
  %v197 = vadd.f32 %v164, %v196
  %198 = vdwg.mxu0
  %199 = vmatpush.msra.mxu0 0.0
  %200 = vmatpush.msra.mxu0 0.0
  %201 = vmatpush.msra.mxu0 0.0
  %202 = vmatpush.msra.mxu0 0.0
  %203 = vmatpush.msra.mxu0 0.0
  %204 = vmatpush.msra.mxu0 0.0
  %205 = vmatpush.msra.mxu0 0.0
  %206 = vmatpush.msra.mxu0 0.0
  %207 = vmatpush.msra.mxu0 0.0
  %208 = vmatpush.msra.mxu0 0.0
  %209 = vmatpush.msra.mxu0 0.0
  %210 = vmatpush.msra.mxu0 0.0
  %v211 = vand.u32 %v30, 4294901760
  %212 = vmatpush.msra.mxu0 %v211
  %v213 = vand.u32 %v29, 4294901760
  %214 = vmatpush.msra.mxu0 %v213
  %v215 = vand.u32 %v28, 4294901760
  %216 = vmatpush.msra.mxu0 %v215
  %v217 = vand.u32 %v27, 4294901760
  %218 = vmatpush.msra.mxu0 %v217
  %v219 = vand.u32 %v37, 4294901760
  %220 = vmatmul.f32.gmra.mxu0 %v219
  %v221 = vpop.f32.mrf.mxu0
  %v222 = vadd.f32 %v197, %v221
  %223 = vdwg.mxu0
  %v224 = vmax.f32 %v222, 0.0
  %v225 = vld [vmem:[%s3] sm:$0xff]
  %v226 = vld [vmem:[%s3 + $0x8] sm:$0xff]
  %v227 = vld [vmem:[%s3 + $0x10] sm:$0xff]
  %v228 = vld [vmem:[%s3 + $0x18] sm:$0xff]
  %v229 = vld [vmem:[%s3 + $0x20] sm:$0xff]
  %v230 = vld [vmem:[%s3 + $0x28] sm:$0xff]
  %v231 = vld [vmem:[%s3 + $0x30] sm:$0xff]
  %v232 = vld [vmem:[%s3 + $0x38] sm:$0xff]
  %v233 = vld [vmem:[%s3 + $0x40] sm:$0xff]
  %v234 = vld [vmem:[%s3 + $0x48] sm:$0xff]
  %v235 = vld [vmem:[%s3 + $0x50] sm:$0xff]
  %v236 = vld [vmem:[%s3 + $0x58] sm:$0xff]
  %v237 = vld [vmem:[%s3 + $0x60] sm:$0xff]
  %v238 = vld [vmem:[%s3 + $0x68] sm:$0xff]
  %v239 = vld [vmem:[%s3 + $0x70] sm:$0xff]
  %v240 = vld [vmem:[%s3 + $0x78] sm:$0xff]
  %v241 = vld [vmem:[%s4] sm:$0x1]
  %v243 = vperm.slane %v241, 0
  %v245 = vand.u32 %v240, 4294901760
  %246 = vmatpush.msra.mxu0 %v245
  %v247 = vand.u32 %v239, 4294901760
  %248 = vmatpush.msra.mxu0 %v247
  %v249 = vand.u32 %v238, 4294901760
  %250 = vmatpush.msra.mxu0 %v249
  %v251 = vand.u32 %v237, 4294901760
  %252 = vmatpush.msra.mxu0 %v251
  %v253 = vand.u32 %v236, 4294901760
  %254 = vmatpush.msra.mxu0 %v253
  %v255 = vand.u32 %v235, 4294901760
  %256 = vmatpush.msra.mxu0 %v255
  %v257 = vand.u32 %v234, 4294901760
  %258 = vmatpush.msra.mxu0 %v257
  %v259 = vand.u32 %v233, 4294901760
  %260 = vmatpush.msra.mxu0 %v259
  %v261 = vand.u32 %v232, 4294901760
  %262 = vmatpush.msra.mxu0 %v261
  %v263 = vand.u32 %v231, 4294901760
  %264 = vmatpush.msra.mxu0 %v263
  %v265 = vand.u32 %v230, 4294901760
  %266 = vmatpush.msra.mxu0 %v265
  %v267 = vand.u32 %v229, 4294901760
  %268 = vmatpush.msra.mxu0 %v267
  %v269 = vand.u32 %v228, 4294901760
  %270 = vmatpush.msra.mxu0 %v269
  %v271 = vand.u32 %v227, 4294901760
  %272 = vmatpush.msra.mxu0 %v271
  %v273 = vand.u32 %v226, 4294901760
  %274 = vmatpush.msra.mxu0 %v273
  %v275 = vand.u32 %v225, 4294901760
  %276 = vmatpush.msra.mxu0 %v275
  %v277 = vand.u32 %v224, 4294901760
  %v278 = vsub.f32 %v224, %v277
  %v279 = vand.u32 %v278, 4294901760
  %v280 = vsub.f32 %v278, %v279
  %v281 = vand.u32 %v280, 4294901760
  %282 = vmatmul.f32.gmra.mxu0 %v281
  %v283 = vpop.f32.mrf.mxu0
  %v284 = vadd.f32 %v243, %v283
  %285 = vdwg.mxu0
  %v286 = vand.u32 %v240, 4294901760
  %v287 = vsub.f32 %v240, %v286
  %v288 = vand.u32 %v287, 4294901760
  %v289 = vsub.f32 %v287, %v288
  %v290 = vand.u32 %v289, 4294901760
  %291 = vmatpush.msra.mxu0 %v290
  %v292 = vand.u32 %v239, 4294901760
  %v293 = vsub.f32 %v239, %v292
  %v294 = vand.u32 %v293, 4294901760
  %v295 = vsub.f32 %v293, %v294
  %v296 = vand.u32 %v295, 4294901760
  %297 = vmatpush.msra.mxu0 %v296
  %v298 = vand.u32 %v238, 4294901760
  %v299 = vsub.f32 %v238, %v298
  %v300 = vand.u32 %v299, 4294901760
  %v301 = vsub.f32 %v299, %v300
  %v302 = vand.u32 %v301, 4294901760
  %303 = vmatpush.msra.mxu0 %v302
  %v304 = vand.u32 %v237, 4294901760
  %v305 = vsub.f32 %v237, %v304
  %v306 = vand.u32 %v305, 4294901760
  %v307 = vsub.f32 %v305, %v306
  %v308 = vand.u32 %v307, 4294901760
  %309 = vmatpush.msra.mxu0 %v308
  %v310 = vand.u32 %v236, 4294901760
  %v311 = vsub.f32 %v236, %v310
  %v312 = vand.u32 %v311, 4294901760
  %v313 = vsub.f32 %v311, %v312
  %v314 = vand.u32 %v313, 4294901760
  %315 = vmatpush.msra.mxu0 %v314
  %v316 = vand.u32 %v235, 4294901760
  %v317 = vsub.f32 %v235, %v316
  %v318 = vand.u32 %v317, 4294901760
  %v319 = vsub.f32 %v317, %v318
  %v320 = vand.u32 %v319, 4294901760
  %321 = vmatpush.msra.mxu0 %v320
  %v322 = vand.u32 %v234, 4294901760
  %v323 = vsub.f32 %v234, %v322
  %v324 = vand.u32 %v323, 4294901760
  %v325 = vsub.f32 %v323, %v324
  %v326 = vand.u32 %v325, 4294901760
  %327 = vmatpush.msra.mxu0 %v326
  %v328 = vand.u32 %v233, 4294901760
  %v329 = vsub.f32 %v233, %v328
  %v330 = vand.u32 %v329, 4294901760
  %v331 = vsub.f32 %v329, %v330
  %v332 = vand.u32 %v331, 4294901760
  %333 = vmatpush.msra.mxu0 %v332
  %v334 = vand.u32 %v232, 4294901760
  %v335 = vsub.f32 %v232, %v334
  %v336 = vand.u32 %v335, 4294901760
  %v337 = vsub.f32 %v335, %v336
  %v338 = vand.u32 %v337, 4294901760
  %339 = vmatpush.msra.mxu0 %v338
  %v340 = vand.u32 %v231, 4294901760
  %v341 = vsub.f32 %v231, %v340
  %v342 = vand.u32 %v341, 4294901760
  %v343 = vsub.f32 %v341, %v342
  %v344 = vand.u32 %v343, 4294901760
  %345 = vmatpush.msra.mxu0 %v344
  %v346 = vand.u32 %v230, 4294901760
  %v347 = vsub.f32 %v230, %v346
  %v348 = vand.u32 %v347, 4294901760
  %v349 = vsub.f32 %v347, %v348
  %v350 = vand.u32 %v349, 4294901760
  %351 = vmatpush.msra.mxu0 %v350
  %v352 = vand.u32 %v229, 4294901760
  %v353 = vsub.f32 %v229, %v352
  %v354 = vand.u32 %v353, 4294901760
  %v355 = vsub.f32 %v353, %v354
  %v356 = vand.u32 %v355, 4294901760
  %357 = vmatpush.msra.mxu0 %v356
  %v358 = vand.u32 %v228, 4294901760
  %v359 = vsub.f32 %v228, %v358
  %v360 = vand.u32 %v359, 4294901760
  %v361 = vsub.f32 %v359, %v360
  %v362 = vand.u32 %v361, 4294901760
  %363 = vmatpush.msra.mxu0 %v362
  %v364 = vand.u32 %v227, 4294901760
  %v365 = vsub.f32 %v227, %v364
  %v366 = vand.u32 %v365, 4294901760
  %v367 = vsub.f32 %v365, %v366
  %v368 = vand.u32 %v367, 4294901760
  %369 = vmatpush.msra.mxu0 %v368
  %v370 = vand.u32 %v226, 4294901760
  %v371 = vsub.f32 %v226, %v370
  %v372 = vand.u32 %v371, 4294901760
  %v373 = vsub.f32 %v371, %v372
  %v374 = vand.u32 %v373, 4294901760
  %375 = vmatpush.msra.mxu0 %v374
  %v376 = vand.u32 %v225, 4294901760
  %v377 = vsub.f32 %v225, %v376
  %v378 = vand.u32 %v377, 4294901760
  %v379 = vsub.f32 %v377, %v378
  %v380 = vand.u32 %v379, 4294901760
  %381 = vmatpush.msra.mxu0 %v380
  %v382 = vand.u32 %v224, 4294901760
  %383 = vmatmul.f32.gmra.mxu0 %v382
  %v384 = vpop.f32.mrf.mxu0
  %v385 = vadd.f32 %v284, %v384
  %386 = vdwg.mxu0
  %v387 = vand.u32 %v240, 4294901760
  %v388 = vsub.f32 %v240, %v387
  %389 = vmatpush.msra.mxu0 %v388
  %v390 = vand.u32 %v239, 4294901760
  %v391 = vsub.f32 %v239, %v390
  %392 = vmatpush.msra.mxu0 %v391
  %v393 = vand.u32 %v238, 4294901760
  %v394 = vsub.f32 %v238, %v393
  %395 = vmatpush.msra.mxu0 %v394
  %v396 = vand.u32 %v237, 4294901760
  %v397 = vsub.f32 %v237, %v396
  %398 = vmatpush.msra.mxu0 %v397
  %v399 = vand.u32 %v236, 4294901760
  %v400 = vsub.f32 %v236, %v399
  %401 = vmatpush.msra.mxu0 %v400
  %v402 = vand.u32 %v235, 4294901760
  %v403 = vsub.f32 %v235, %v402
  %404 = vmatpush.msra.mxu0 %v403
  %v405 = vand.u32 %v234, 4294901760
  %v406 = vsub.f32 %v234, %v405
  %407 = vmatpush.msra.mxu0 %v406
  %v408 = vand.u32 %v233, 4294901760
  %v409 = vsub.f32 %v233, %v408
  %410 = vmatpush.msra.mxu0 %v409
  %v411 = vand.u32 %v232, 4294901760
  %v412 = vsub.f32 %v232, %v411
  %413 = vmatpush.msra.mxu0 %v412
  %v414 = vand.u32 %v231, 4294901760
  %v415 = vsub.f32 %v231, %v414
  %416 = vmatpush.msra.mxu0 %v415
  %v417 = vand.u32 %v230, 4294901760
  %v418 = vsub.f32 %v230, %v417
  %419 = vmatpush.msra.mxu0 %v418
  %v420 = vand.u32 %v229, 4294901760
  %v421 = vsub.f32 %v229, %v420
  %422 = vmatpush.msra.mxu0 %v421
  %v423 = vand.u32 %v228, 4294901760
  %v424 = vsub.f32 %v228, %v423
  %425 = vmatpush.msra.mxu0 %v424
  %v426 = vand.u32 %v227, 4294901760
  %v427 = vsub.f32 %v227, %v426
  %428 = vmatpush.msra.mxu0 %v427
  %v429 = vand.u32 %v226, 4294901760
  %v430 = vsub.f32 %v226, %v429
  %431 = vmatpush.msra.mxu0 %v430
  %v432 = vand.u32 %v225, 4294901760
  %v433 = vsub.f32 %v225, %v432
  %434 = vmatpush.msra.mxu0 %v433
  %v435 = vand.u32 %v224, 4294901760
  %v436 = vsub.f32 %v224, %v435
  %437 = vmatmul.f32.gmra.mxu0 %v436
  %v438 = vpop.f32.mrf.mxu0
  %v439 = vadd.f32 %v385, %v438
  %440 = vdwg.mxu0
  %v441 = vand.u32 %v240, 4294901760
  %442 = vmatpush.msra.mxu0 %v441
  %v443 = vand.u32 %v239, 4294901760
  %444 = vmatpush.msra.mxu0 %v443
  %v445 = vand.u32 %v238, 4294901760
  %446 = vmatpush.msra.mxu0 %v445
  %v447 = vand.u32 %v237, 4294901760
  %448 = vmatpush.msra.mxu0 %v447
  %v449 = vand.u32 %v236, 4294901760
  %450 = vmatpush.msra.mxu0 %v449
  %v451 = vand.u32 %v235, 4294901760
  %452 = vmatpush.msra.mxu0 %v451
  %v453 = vand.u32 %v234, 4294901760
  %454 = vmatpush.msra.mxu0 %v453
  %v455 = vand.u32 %v233, 4294901760
  %456 = vmatpush.msra.mxu0 %v455
  %v457 = vand.u32 %v232, 4294901760
  %458 = vmatpush.msra.mxu0 %v457
  %v459 = vand.u32 %v231, 4294901760
  %460 = vmatpush.msra.mxu0 %v459
  %v461 = vand.u32 %v230, 4294901760
  %462 = vmatpush.msra.mxu0 %v461
  %v463 = vand.u32 %v229, 4294901760
  %464 = vmatpush.msra.mxu0 %v463
  %v465 = vand.u32 %v228, 4294901760
  %466 = vmatpush.msra.mxu0 %v465
  %v467 = vand.u32 %v227, 4294901760
  %468 = vmatpush.msra.mxu0 %v467
  %v469 = vand.u32 %v226, 4294901760
  %470 = vmatpush.msra.mxu0 %v469
  %v471 = vand.u32 %v225, 4294901760
  %472 = vmatpush.msra.mxu0 %v471
  %v473 = vand.u32 %v224, 4294901760
  %v474 = vsub.f32 %v224, %v473
  %v475 = vand.u32 %v474, 4294901760
  %476 = vmatmul.f32.gmra.mxu0 %v475
  %v477 = vpop.f32.mrf.mxu0
  %v478 = vadd.f32 %v439, %v477
  %479 = vdwg.mxu0
  %v480 = vand.u32 %v240, 4294901760
  %v481 = vsub.f32 %v240, %v480
  %v482 = vand.u32 %v481, 4294901760
  %483 = vmatpush.msra.mxu0 %v482
  %v484 = vand.u32 %v239, 4294901760
  %v485 = vsub.f32 %v239, %v484
  %v486 = vand.u32 %v485, 4294901760
  %487 = vmatpush.msra.mxu0 %v486
  %v488 = vand.u32 %v238, 4294901760
  %v489 = vsub.f32 %v238, %v488
  %v490 = vand.u32 %v489, 4294901760
  %491 = vmatpush.msra.mxu0 %v490
  %v492 = vand.u32 %v237, 4294901760
  %v493 = vsub.f32 %v237, %v492
  %v494 = vand.u32 %v493, 4294901760
  %495 = vmatpush.msra.mxu0 %v494
  %v496 = vand.u32 %v236, 4294901760
  %v497 = vsub.f32 %v236, %v496
  %v498 = vand.u32 %v497, 4294901760
  %499 = vmatpush.msra.mxu0 %v498
  %v500 = vand.u32 %v235, 4294901760
  %v501 = vsub.f32 %v235, %v500
  %v502 = vand.u32 %v501, 4294901760
  %503 = vmatpush.msra.mxu0 %v502
  %v504 = vand.u32 %v234, 4294901760
  %v505 = vsub.f32 %v234, %v504
  %v506 = vand.u32 %v505, 4294901760
  %507 = vmatpush.msra.mxu0 %v506
  %v508 = vand.u32 %v233, 4294901760
  %v509 = vsub.f32 %v233, %v508
  %v510 = vand.u32 %v509, 4294901760
  %511 = vmatpush.msra.mxu0 %v510
  %v512 = vand.u32 %v232, 4294901760
  %v513 = vsub.f32 %v232, %v512
  %v514 = vand.u32 %v513, 4294901760
  %515 = vmatpush.msra.mxu0 %v514
  %v516 = vand.u32 %v231, 4294901760
  %v517 = vsub.f32 %v231, %v516
  %v518 = vand.u32 %v517, 4294901760
  %519 = vmatpush.msra.mxu0 %v518
  %v520 = vand.u32 %v230, 4294901760
  %v521 = vsub.f32 %v230, %v520
  %v522 = vand.u32 %v521, 4294901760
  %523 = vmatpush.msra.mxu0 %v522
  %v524 = vand.u32 %v229, 4294901760
  %v525 = vsub.f32 %v229, %v524
  %v526 = vand.u32 %v525, 4294901760
  %527 = vmatpush.msra.mxu0 %v526
  %v528 = vand.u32 %v228, 4294901760
  %v529 = vsub.f32 %v228, %v528
  %v530 = vand.u32 %v529, 4294901760
  %531 = vmatpush.msra.mxu0 %v530
  %v532 = vand.u32 %v227, 4294901760
  %v533 = vsub.f32 %v227, %v532
  %v534 = vand.u32 %v533, 4294901760
  %535 = vmatpush.msra.mxu0 %v534
  %v536 = vand.u32 %v226, 4294901760
  %v537 = vsub.f32 %v226, %v536
  %v538 = vand.u32 %v537, 4294901760
  %539 = vmatpush.msra.mxu0 %v538
  %v540 = vand.u32 %v225, 4294901760
  %v541 = vsub.f32 %v225, %v540
  %v542 = vand.u32 %v541, 4294901760
  %543 = vmatpush.msra.mxu0 %v542
  %v544 = vand.u32 %v224, 4294901760
  %545 = vmatmul.f32.gmra.mxu0 %v544
  %v546 = vpop.f32.mrf.mxu0
  %v547 = vadd.f32 %v478, %v546
  %548 = vdwg.mxu0
  %v549 = vand.u32 %v240, 4294901760
  %550 = vmatpush.msra.mxu0 %v549
  %v551 = vand.u32 %v239, 4294901760
  %552 = vmatpush.msra.mxu0 %v551
  %v553 = vand.u32 %v238, 4294901760
  %554 = vmatpush.msra.mxu0 %v553
  %v555 = vand.u32 %v237, 4294901760
  %556 = vmatpush.msra.mxu0 %v555
  %v557 = vand.u32 %v236, 4294901760
  %558 = vmatpush.msra.mxu0 %v557
  %v559 = vand.u32 %v235, 4294901760
  %560 = vmatpush.msra.mxu0 %v559
  %v561 = vand.u32 %v234, 4294901760
  %562 = vmatpush.msra.mxu0 %v561
  %v563 = vand.u32 %v233, 4294901760
  %564 = vmatpush.msra.mxu0 %v563
  %v565 = vand.u32 %v232, 4294901760
  %566 = vmatpush.msra.mxu0 %v565
  %v567 = vand.u32 %v231, 4294901760
  %568 = vmatpush.msra.mxu0 %v567
  %v569 = vand.u32 %v230, 4294901760
  %570 = vmatpush.msra.mxu0 %v569
  %v571 = vand.u32 %v229, 4294901760
  %572 = vmatpush.msra.mxu0 %v571
  %v573 = vand.u32 %v228, 4294901760
  %574 = vmatpush.msra.mxu0 %v573
  %v575 = vand.u32 %v227, 4294901760
  %576 = vmatpush.msra.mxu0 %v575
  %v577 = vand.u32 %v226, 4294901760
  %578 = vmatpush.msra.mxu0 %v577
  %v579 = vand.u32 %v225, 4294901760
  %580 = vmatpush.msra.mxu0 %v579
  %v581 = vand.u32 %v224, 4294901760
  %582 = vmatmul.f32.gmra.mxu0 %v581
  %v583 = vpop.f32.mrf.mxu0
  %v584 = vadd.f32 %v547, %v583
  %585 = vdwg.mxu0
  %v586 = vmax.f32 %v584, 0.0
  %v587 = vld [vmem:[%s5] sm:$0xff]
  %v588 = vld [vmem:[%s5 + $0x8] sm:$0xff]
  %v589 = vld [vmem:[%s5 + $0x10] sm:$0xff]
  %v590 = vld [vmem:[%s5 + $0x18] sm:$0xff]
  %v591 = vld [vmem:[%s5 + $0x20] sm:$0xff]
  %v592 = vld [vmem:[%s5 + $0x28] sm:$0xff]
  %v593 = vld [vmem:[%s5 + $0x30] sm:$0xff]
  %v594 = vld [vmem:[%s5 + $0x38] sm:$0xff]
  %v595 = vld [vmem:[%s6] sm:$0x1]
  %v597 = vperm.slane %v595, 0
  %vm599 = vcmask 523264
  %v601 = vsel %vm599, %v586, 0
  %603 = vmatpush.msra.mxu0 0.0
  %604 = vmatpush.msra.mxu0 0.0
  %605 = vmatpush.msra.mxu0 0.0
  %606 = vmatpush.msra.mxu0 0.0
  %607 = vmatpush.msra.mxu0 0.0
  %608 = vmatpush.msra.mxu0 0.0
  %609 = vmatpush.msra.mxu0 0.0
  %610 = vmatpush.msra.mxu0 0.0
  %v611 = vand.u32 %v594, 4294901760
  %612 = vmatpush.msra.mxu0 %v611
  %v613 = vand.u32 %v593, 4294901760
  %614 = vmatpush.msra.mxu0 %v613
  %v615 = vand.u32 %v592, 4294901760
  %616 = vmatpush.msra.mxu0 %v615
  %v617 = vand.u32 %v591, 4294901760
  %618 = vmatpush.msra.mxu0 %v617
  %v619 = vand.u32 %v590, 4294901760
  %620 = vmatpush.msra.mxu0 %v619
  %v621 = vand.u32 %v589, 4294901760
  %622 = vmatpush.msra.mxu0 %v621
  %v623 = vand.u32 %v588, 4294901760
  %624 = vmatpush.msra.mxu0 %v623
  %v625 = vand.u32 %v587, 4294901760
  %626 = vmatpush.msra.mxu0 %v625
  %v627 = vand.u32 %v601, 4294901760
  %v628 = vsub.f32 %v601, %v627
  %v629 = vand.u32 %v628, 4294901760
  %v630 = vsub.f32 %v628, %v629
  %v631 = vand.u32 %v630, 4294901760
  %632 = vmatmul.f32.gmra.mxu0 %v631
  %v633 = vpop.f32.mrf.mxu0
  %v634 = vadd.f32 %v597, %v633
  %635 = vdwg.mxu0
  %636 = vmatpush.msra.mxu0 0.0
  %637 = vmatpush.msra.mxu0 0.0
  %638 = vmatpush.msra.mxu0 0.0
  %639 = vmatpush.msra.mxu0 0.0
  %640 = vmatpush.msra.mxu0 0.0
  %641 = vmatpush.msra.mxu0 0.0
  %642 = vmatpush.msra.mxu0 0.0
  %643 = vmatpush.msra.mxu0 0.0
  %v644 = vand.u32 %v594, 4294901760
  %v645 = vsub.f32 %v594, %v644
  %v646 = vand.u32 %v645, 4294901760
  %v647 = vsub.f32 %v645, %v646
  %v648 = vand.u32 %v647, 4294901760
  %649 = vmatpush.msra.mxu0 %v648
  %v650 = vand.u32 %v593, 4294901760
  %v651 = vsub.f32 %v593, %v650
  %v652 = vand.u32 %v651, 4294901760
  %v653 = vsub.f32 %v651, %v652
  %v654 = vand.u32 %v653, 4294901760
  %655 = vmatpush.msra.mxu0 %v654
  %v656 = vand.u32 %v592, 4294901760
  %v657 = vsub.f32 %v592, %v656
  %v658 = vand.u32 %v657, 4294901760
  %v659 = vsub.f32 %v657, %v658
  %v660 = vand.u32 %v659, 4294901760
  %661 = vmatpush.msra.mxu0 %v660
  %v662 = vand.u32 %v591, 4294901760
  %v663 = vsub.f32 %v591, %v662
  %v664 = vand.u32 %v663, 4294901760
  %v665 = vsub.f32 %v663, %v664
  %v666 = vand.u32 %v665, 4294901760
  %667 = vmatpush.msra.mxu0 %v666
  %v668 = vand.u32 %v590, 4294901760
  %v669 = vsub.f32 %v590, %v668
  %v670 = vand.u32 %v669, 4294901760
  %v671 = vsub.f32 %v669, %v670
  %v672 = vand.u32 %v671, 4294901760
  %673 = vmatpush.msra.mxu0 %v672
  %v674 = vand.u32 %v589, 4294901760
  %v675 = vsub.f32 %v589, %v674
  %v676 = vand.u32 %v675, 4294901760
  %v677 = vsub.f32 %v675, %v676
  %v678 = vand.u32 %v677, 4294901760
  %679 = vmatpush.msra.mxu0 %v678
  %v680 = vand.u32 %v588, 4294901760
  %v681 = vsub.f32 %v588, %v680
  %v682 = vand.u32 %v681, 4294901760
  %v683 = vsub.f32 %v681, %v682
  %v684 = vand.u32 %v683, 4294901760
  %685 = vmatpush.msra.mxu0 %v684
  %v686 = vand.u32 %v587, 4294901760
  %v687 = vsub.f32 %v587, %v686
  %v688 = vand.u32 %v687, 4294901760
  %v689 = vsub.f32 %v687, %v688
  %v690 = vand.u32 %v689, 4294901760
  %691 = vmatpush.msra.mxu0 %v690
  %v692 = vand.u32 %v601, 4294901760
  %693 = vmatmul.f32.gmra.mxu0 %v692
  %v694 = vpop.f32.mrf.mxu0
  %v695 = vadd.f32 %v634, %v694
  %696 = vdwg.mxu0
  %697 = vmatpush.msra.mxu0 0.0
  %698 = vmatpush.msra.mxu0 0.0
  %699 = vmatpush.msra.mxu0 0.0
  %700 = vmatpush.msra.mxu0 0.0
  %701 = vmatpush.msra.mxu0 0.0
  %702 = vmatpush.msra.mxu0 0.0
  %703 = vmatpush.msra.mxu0 0.0
  %704 = vmatpush.msra.mxu0 0.0
  %v705 = vand.u32 %v594, 4294901760
  %v706 = vsub.f32 %v594, %v705
  %707 = vmatpush.msra.mxu0 %v706
  %v708 = vand.u32 %v593, 4294901760
  %v709 = vsub.f32 %v593, %v708
  %710 = vmatpush.msra.mxu0 %v709
  %v711 = vand.u32 %v592, 4294901760
  %v712 = vsub.f32 %v592, %v711
  %713 = vmatpush.msra.mxu0 %v712
  %v714 = vand.u32 %v591, 4294901760
  %v715 = vsub.f32 %v591, %v714
  %716 = vmatpush.msra.mxu0 %v715
  %v717 = vand.u32 %v590, 4294901760
  %v718 = vsub.f32 %v590, %v717
  %719 = vmatpush.msra.mxu0 %v718
  %v720 = vand.u32 %v589, 4294901760
  %v721 = vsub.f32 %v589, %v720
  %722 = vmatpush.msra.mxu0 %v721
  %v723 = vand.u32 %v588, 4294901760
  %v724 = vsub.f32 %v588, %v723
  %725 = vmatpush.msra.mxu0 %v724
  %v726 = vand.u32 %v587, 4294901760
  %v727 = vsub.f32 %v587, %v726
  %728 = vmatpush.msra.mxu0 %v727
  %v729 = vand.u32 %v601, 4294901760
  %v730 = vsub.f32 %v601, %v729
  %731 = vmatmul.f32.gmra.mxu0 %v730
  %v732 = vpop.f32.mrf.mxu0
  %v733 = vadd.f32 %v695, %v732
  %734 = vdwg.mxu0
  %735 = vmatpush.msra.mxu0 0.0
  %736 = vmatpush.msra.mxu0 0.0
  %737 = vmatpush.msra.mxu0 0.0
  %738 = vmatpush.msra.mxu0 0.0
  %739 = vmatpush.msra.mxu0 0.0
  %740 = vmatpush.msra.mxu0 0.0
  %741 = vmatpush.msra.mxu0 0.0
  %742 = vmatpush.msra.mxu0 0.0
  %v743 = vand.u32 %v594, 4294901760
  %744 = vmatpush.msra.mxu0 %v743
  %v745 = vand.u32 %v593, 4294901760
  %746 = vmatpush.msra.mxu0 %v745
  %v747 = vand.u32 %v592, 4294901760
  %748 = vmatpush.msra.mxu0 %v747
  %v749 = vand.u32 %v591, 4294901760
  %750 = vmatpush.msra.mxu0 %v749
  %v751 = vand.u32 %v590, 4294901760
  %752 = vmatpush.msra.mxu0 %v751
  %v753 = vand.u32 %v589, 4294901760
  %754 = vmatpush.msra.mxu0 %v753
  %v755 = vand.u32 %v588, 4294901760
  %756 = vmatpush.msra.mxu0 %v755
  %v757 = vand.u32 %v587, 4294901760
  %758 = vmatpush.msra.mxu0 %v757
  %v759 = vand.u32 %v601, 4294901760
  %v760 = vsub.f32 %v601, %v759
  %v761 = vand.u32 %v760, 4294901760
  %762 = vmatmul.f32.gmra.mxu0 %v761
  %v763 = vpop.f32.mrf.mxu0
  %v764 = vadd.f32 %v733, %v763
  %765 = vdwg.mxu0
  %766 = vmatpush.msra.mxu0 0.0
  %767 = vmatpush.msra.mxu0 0.0
  %768 = vmatpush.msra.mxu0 0.0
  %769 = vmatpush.msra.mxu0 0.0
  %770 = vmatpush.msra.mxu0 0.0
  %771 = vmatpush.msra.mxu0 0.0
  %772 = vmatpush.msra.mxu0 0.0
  %773 = vmatpush.msra.mxu0 0.0
  %v774 = vand.u32 %v594, 4294901760
  %v775 = vsub.f32 %v594, %v774
  %v776 = vand.u32 %v775, 4294901760
  %777 = vmatpush.msra.mxu0 %v776
  %v778 = vand.u32 %v593, 4294901760
  %v779 = vsub.f32 %v593, %v778
  %v780 = vand.u32 %v779, 4294901760
  %781 = vmatpush.msra.mxu0 %v780
  %v782 = vand.u32 %v592, 4294901760
  %v783 = vsub.f32 %v592, %v782
  %v784 = vand.u32 %v783, 4294901760
  %785 = vmatpush.msra.mxu0 %v784
  %v786 = vand.u32 %v591, 4294901760
  %v787 = vsub.f32 %v591, %v786
  %v788 = vand.u32 %v787, 4294901760
  %789 = vmatpush.msra.mxu0 %v788
  %v790 = vand.u32 %v590, 4294901760
  %v791 = vsub.f32 %v590, %v790
  %v792 = vand.u32 %v791, 4294901760
  %793 = vmatpush.msra.mxu0 %v792
  %v794 = vand.u32 %v589, 4294901760
  %v795 = vsub.f32 %v589, %v794
  %v796 = vand.u32 %v795, 4294901760
  %797 = vmatpush.msra.mxu0 %v796
  %v798 = vand.u32 %v588, 4294901760
  %v799 = vsub.f32 %v588, %v798
  %v800 = vand.u32 %v799, 4294901760
  %801 = vmatpush.msra.mxu0 %v800
  %v802 = vand.u32 %v587, 4294901760
  %v803 = vsub.f32 %v587, %v802
  %v804 = vand.u32 %v803, 4294901760
  %805 = vmatpush.msra.mxu0 %v804
  %v806 = vand.u32 %v601, 4294901760
  %807 = vmatmul.f32.gmra.mxu0 %v806
  %v808 = vpop.f32.mrf.mxu0
  %v809 = vadd.f32 %v764, %v808
  %810 = vdwg.mxu0
  %811 = vmatpush.msra.mxu0 0.0
  %812 = vmatpush.msra.mxu0 0.0
  %813 = vmatpush.msra.mxu0 0.0
  %814 = vmatpush.msra.mxu0 0.0
  %815 = vmatpush.msra.mxu0 0.0
  %816 = vmatpush.msra.mxu0 0.0
  %817 = vmatpush.msra.mxu0 0.0
  %818 = vmatpush.msra.mxu0 0.0
  %v819 = vand.u32 %v594, 4294901760
  %820 = vmatpush.msra.mxu0 %v819
  %v821 = vand.u32 %v593, 4294901760
  %822 = vmatpush.msra.mxu0 %v821
  %v823 = vand.u32 %v592, 4294901760
  %824 = vmatpush.msra.mxu0 %v823
  %v825 = vand.u32 %v591, 4294901760
  %826 = vmatpush.msra.mxu0 %v825
  %v827 = vand.u32 %v590, 4294901760
  %828 = vmatpush.msra.mxu0 %v827
  %v829 = vand.u32 %v589, 4294901760
  %830 = vmatpush.msra.mxu0 %v829
  %v831 = vand.u32 %v588, 4294901760
  %832 = vmatpush.msra.mxu0 %v831
  %v833 = vand.u32 %v587, 4294901760
  %834 = vmatpush.msra.mxu0 %v833
  %v835 = vand.u32 %v601, 4294901760
  %836 = vmatmul.f32.gmra.mxu0 %v835
  %v837 = vpop.f32.mrf.mxu0
  %v838 = vadd.f32 %v809, %v837
  %839 = vdwg.mxu0
  %vm840 = vcmask 15360
  %841 = vst.msk [vmem:[%s7] sm:$0xff] %vm840, %v838
  // Predicated region
  $region30: #{tpu_custom_call.1} parent=0 // pred_check
    _
  $region31: #{tpu_custom_call.1} parent=0 // pred_check_branch
    %843 = sbr.rel (0) target = $region33
  $region32: #{tpu_custom_call.1} parent=0 // pred_region
    _
  $region33: #{tpu_custom_call.1} parent=0 // pred_fallthru
    _
  // Predicated region
  $region34: #{tpu_custom_call.1} parent=0 // pred_check
    _
  $region35: #{tpu_custom_call.1} parent=0 // pred_check_branch
    %845 = sbr.rel (0) target = $region37
  $region36: #{tpu_custom_call.1} parent=0 // pred_region
    _
  $region37: #{tpu_custom_call.1} parent=0 // pred_fallthru
    _

</llo_original>
